<compile_context>
chip_gen: v7x
topology: tpu7x:2x2x1
jax: 0.10.0
libtpu: 0.0.40
codegen_flags: <defaults>
</compile_context>

<pallas_src>
import functools

import jax
import jax.numpy as jnp
from jax.experimental import pallas as pl
from jax.experimental.pallas import tpu as pltpu


# ---------------------------------------------------------------------------
# Parameter init / preparation
# ---------------------------------------------------------------------------

def init_co_attention_params(key, dim, heads, dim_head):
    """Deterministic init mirroring nn.Linear default shapes (weights (in, out))."""
    inner = heads * dim_head
    ks = jax.random.split(key, 6)

    def uinit(k, shape, fan_in):
        bound = 1.0 / float(fan_in) ** 0.5
        return jax.random.uniform(k, shape, jnp.float32, -bound, bound)

    return {
        # to_qkv1 / to_qkv2: Linear(dim, 3*inner, bias=False)
        "w_qkv1": uinit(ks[0], (dim, 3 * inner), dim),
        "w_qkv2": uinit(ks[1], (dim, 3 * inner), dim),
        # to_out1 / to_out2: Linear(inner, dim) with bias
        "w_out1": uinit(ks[2], (inner, dim), inner),
        "b_out1": uinit(ks[3], (1, dim), inner),
        "w_out2": uinit(ks[4], (inner, dim), inner),
        "b_out2": uinit(ks[5], (1, dim), inner),
    }


def prepare_co_attention_params(params, heads, dim_head):
    """One-time static weight transform: fold 1/sqrt(dim_head) into the
    q-columns of both QKV weights so the kernel needs no per-element scale."""
    inner = heads * dim_head
    scale = dim_head ** (-0.5)

    def fold(w):
        return jnp.concatenate([w[:, :inner] * scale, w[:, inner:]], axis=-1)

    p = dict(params)
    p["w_qkv1"] = fold(params["w_qkv1"])
    p["w_qkv2"] = fold(params["w_qkv2"])
    return p


# ---------------------------------------------------------------------------
# Fused co_attention kernel (one grid step per batch element)
# ---------------------------------------------------------------------------

def _co_attention_kernel(img_ref, txt_ref,
                         wqkv1_ref, wqkv2_ref,
                         wout1_ref, bout1_ref, wout2_ref, bout2_ref,
                         out_i_ref, out_t_ref, attn_t_ref,
                         qkv_i_scr, qkv_t_scr, acc_i_scr, acc_t_scr,
                         *, heads, dim_head):
    # Block shapes (per batch element b):
    #   img_ref : (1, Ni, dim)        txt_ref : (1, Nt, dim)
    #   wqkv*   : (dim, 3*inner)      wout*   : (inner, dim)   bout*: (1, dim)
    #   out_i   : (1, Ni, dim)        out_t   : (1, Nt, dim)
    #   attn_t  : (1, heads, Nt, Ni)
    # Scratch:
    #   qkv_*_scr : (N, 3*inner) in the matmul-input dtype
    #   acc_*_scr : (N, dim) f32 output-projection accumulators
    inner = heads * dim_head

    x_i = img_ref[0]
    x_t = txt_ref[0]

    # QKV projections (MXU, f32 accumulation).  Scale is pre-folded into the
    # q-columns of wqkv*.  Results live in VMEM scratch so per-head slices are
    # cheap ref loads rather than vreg relayouts.
    qkv_i_scr[...] = jnp.dot(
        x_i, wqkv1_ref[...], preferred_element_type=jnp.float32
    ).astype(qkv_i_scr.dtype)
    qkv_t_scr[...] = jnp.dot(
        x_t, wqkv2_ref[...], preferred_element_type=jnp.float32
    ).astype(qkv_t_scr.dtype)

    acc_i_scr[...] = jnp.zeros_like(acc_i_scr)
    acc_t_scr[...] = jnp.zeros_like(acc_t_scr)

    # heads is small and static -> unrolled Python loop; live ranges are
    # bounded by the per-head VMEM scratch writes (no list + concatenate).
    for h in range(heads):
        q_sl = slice(h * dim_head, (h + 1) * dim_head)
        k_sl = slice(inner + h * dim_head, inner + (h + 1) * dim_head)
        v_sl = slice(2 * inner + h * dim_head, 2 * inner + (h + 1) * dim_head)
        w_sl = slice(h * dim_head, (h + 1) * dim_head)

        q_i = qkv_i_scr[:, q_sl]
        k_i = qkv_i_scr[:, k_sl]
        v_i = qkv_i_scr[:, v_sl]
        q_t = qkv_t_scr[:, q_sl]
        k_t = qkv_t_scr[:, k_sl]
        v_t = qkv_t_scr[:, v_sl]

        # ---- image queries attend over text keys/values (attn map discarded)
        s_i = jax.lax.dot_general(q_i, k_t, (((1,), (1,)), ((), ())),
                                  preferred_element_type=jnp.float32)
        m_i = jnp.max(s_i, axis=-1, keepdims=True)
        e_i = jnp.exp(s_i - m_i)
        p_i = e_i * pl.reciprocal(jnp.sum(e_i, axis=-1, keepdims=True),
                                  approx=True)           # EUP vrcp, map unused
        o_i = jnp.dot(p_i.astype(v_t.dtype), v_t,
                      preferred_element_type=jnp.float32)
        # Fold the output projection per head: out_i += o_i @ W_out1[rows_h, :]
        acc_i_scr[...] += jnp.dot(o_i.astype(wout1_ref.dtype),
                                  wout1_ref[w_sl, :],
                                  preferred_element_type=jnp.float32)

        # ---- text queries attend over image keys/values (attn map returned)
        s_t = jax.lax.dot_general(q_t, k_i, (((1,), (1,)), ((), ())),
                                  preferred_element_type=jnp.float32)
        m_t = jnp.max(s_t, axis=-1, keepdims=True)
        e_t = jnp.exp(s_t - m_t)
        denom_t = jnp.sum(e_t, axis=-1, keepdims=True)
        p_t = e_t / denom_t                 # exact: returned rows sum to 1
        attn_t_ref[0, h] = p_t.astype(attn_t_ref.dtype)
        o_t = jnp.dot(p_t.astype(v_i.dtype), v_i,
                      preferred_element_type=jnp.float32)
        acc_t_scr[...] += jnp.dot(o_t.astype(wout2_ref.dtype),
                                  wout2_ref[w_sl, :],
                                  preferred_element_type=jnp.float32)

    # Biases + final lane-dense stores.
    out_i_ref[0] = (acc_i_scr[...] + bout1_ref[...].astype(jnp.float32)
                    ).astype(out_i_ref.dtype)
    out_t_ref[0] = (acc_t_scr[...] + bout2_ref[...].astype(jnp.float32)
                    ).astype(out_t_ref.dtype)


# ---------------------------------------------------------------------------
# Forward pass wrapper
# ---------------------------------------------------------------------------

def co_attention_forward(params, img_feature, text_feature, heads, dim_head,
                         *, compute_dtype=None, attn_dtype=jnp.float32,
                         vmem_limit_bytes=None):
    """Forward pass of co_attention (expects *prepared* params, i.e. the
    1/sqrt(dim_head) scale already folded into the q-columns of w_qkv*).

    compute_dtype: optional matmul-input dtype (jnp.bfloat16 on v6e/v7x).
    attn_dtype:    dtype of the returned attention map (bf16 halves writeback).
    Accumulation and softmax stay f32.
    """
    B, Ni, dim = img_feature.shape
    Nt = text_feature.shape[1]
    inner = heads * dim_head
    out_dtype = img_feature.dtype
    cdt = out_dtype if compute_dtype is None else compute_dtype

    x_i = img_feature.astype(cdt)
    x_t = text_feature.astype(cdt)
    w_qkv1 = params["w_qkv1"].astype(cdt)
    w_qkv2 = params["w_qkv2"].astype(cdt)
    w_out1 = params["w_out1"].astype(cdt)
    w_out2 = params["w_out2"].astype(cdt)
    b_out1 = params["b_out1"].astype(jnp.float32)
    b_out2 = params["b_out2"].astype(jnp.float32)

    kernel = functools.partial(_co_attention_kernel,
                               heads=heads, dim_head=dim_head)

    resident = lambda b: (0, 0)     # constant index -> weight stays in VMEM
    in_specs = [
        pl.BlockSpec((1, Ni, dim), lambda b: (b, 0, 0)),
        pl.BlockSpec((1, Nt, dim), lambda b: (b, 0, 0)),
        pl.BlockSpec((dim, 3 * inner), resident),
        pl.BlockSpec((dim, 3 * inner), resident),
        pl.BlockSpec((inner, dim), resident),
        pl.BlockSpec((1, dim), resident),
        pl.BlockSpec((inner, dim), resident),
        pl.BlockSpec((1, dim), resident),
    ]
    out_shape = (
        jax.ShapeDtypeStruct((B, Ni, dim), out_dtype),
        jax.ShapeDtypeStruct((B, Nt, dim), out_dtype),
        jax.ShapeDtypeStruct((B, heads, Nt, Ni), attn_dtype),
    )
    out_specs = (
        pl.BlockSpec((1, Ni, dim), lambda b: (b, 0, 0)),
        pl.BlockSpec((1, Nt, dim), lambda b: (b, 0, 0)),
        pl.BlockSpec((1, heads, Nt, Ni), lambda b: (b, 0, 0, 0)),
    )
    scratch_shapes = [
        pltpu.VMEM((Ni, 3 * inner), cdt),      # qkv_i
        pltpu.VMEM((Nt, 3 * inner), cdt),      # qkv_t
        pltpu.VMEM((Ni, dim), jnp.float32),    # out_i accumulator
        pltpu.VMEM((Nt, dim), jnp.float32),    # out_t accumulator
    ]

    cp_kwargs = dict(dimension_semantics=("parallel",))
    if vmem_limit_bytes is not None:
        cp_kwargs["vmem_limit_bytes"] = vmem_limit_bytes

    out_i, out_t, attn_t = pl.pallas_call(
        kernel,
        out_shape=out_shape,
        grid=(B,),
        in_specs=in_specs,
        out_specs=out_specs,
        scratch_shapes=scratch_shapes,
        compiler_params=pltpu.CompilerParams(**cp_kwargs),
    )(x_i, x_t, w_qkv1, w_qkv2, w_out1, b_out1, w_out2, b_out2)

    return out_i, out_t, attn_t


# ---------------------------------------------------------------------------
# Pure-JAX reference (uses the RAW, unprepared params)
# ---------------------------------------------------------------------------

def _reference(params, img, txt, heads, dim_head):
    B, Ni, _ = img.shape
    Nt = txt.shape[1]
    inner = heads * dim_head
    scale = dim_head ** (-0.5)
    qkv_i = img @ params["w_qkv1"]
    qkv_t = txt @ params["w_qkv2"]

    def split(qkv, N):
        q, k, v = jnp.split(qkv, 3, axis=-1)
        r = lambda t: t.reshape(B, N, heads, dim_head).transpose(0, 2, 1, 3)
        return r(q), r(k), r(v)

    q_i, k_i, v_i = split(qkv_i, Ni)
    q_t, k_t, v_t = split(qkv_t, Nt)

    def attend(q, k, v):
        s = jnp.einsum("bhqd,bhkd->bhqk", q, k) * scale
        a = jax.nn.softmax(s, axis=-1)
        o = jnp.einsum("bhqk,bhkd->bhqd", a, v)
        return o, a

    o_i, _ = attend(q_i, k_t, v_t)
    o_t, a_t = attend(q_t, k_i, v_i)
    merge = lambda o, N: o.transpose(0, 2, 1, 3).reshape(B, N, inner)
    out_i = merge(o_i, Ni) @ params["w_out1"] + params["b_out1"]
    out_t = merge(o_t, Nt) @ params["w_out2"] + params["b_out2"]
    return out_i, out_t, a_t


# ---------------------------------------------------------------------------
# Demo / smoke test
# ---------------------------------------------------------------------------

if __name__ == "__main__":
    dim = 32
    heads = 2
    dim_head = 16
    B, Ni, Nt = 2, 16, 8

    key = jax.random.PRNGKey(0)
    k_params, k_img, k_txt = jax.random.split(key, 3)

    raw_params = init_co_attention_params(k_params, dim, heads, dim_head)
    params = prepare_co_attention_params(raw_params, heads, dim_head)

    img = jax.random.normal(k_img, (B, Ni, dim), jnp.float32)
    txt = jax.random.normal(k_txt, (B, Nt, dim), jnp.float32)

    out_i, out_t, attn_t = co_attention_forward(params, img, txt,
                                                heads, dim_head)
    jax.block_until_ready((out_i, out_t, attn_t))

    assert out_i.shape == (B, Ni, dim)
    assert out_t.shape == (B, Nt, dim)
    assert attn_t.shape == (B, heads, Nt, Ni)

    ref_i, ref_t, ref_a = _reference(raw_params, img, txt, heads, dim_head)
    assert jnp.allclose(out_i, ref_i, rtol=1e-2, atol=1e-2)
    assert jnp.allclose(out_t, ref_t, rtol=1e-2, atol=1e-2)
    assert jnp.allclose(attn_t, ref_a, rtol=1e-2, atol=1e-2)

    print("KERNEL_OK")
</pallas_src>

<mosaic_0001>
module attributes {stable_mosaic.version = 11 : i64} {
  func.func @_co_attention_kernel(%arg0: i32, %arg1: memref<1x16x32xf32, #tpu.memory_space<vmem>>, %arg2: memref<1x8x32xf32, #tpu.memory_space<vmem>>, %arg3: memref<32x96xf32, #tpu.memory_space<vmem>>, %arg4: memref<32x96xf32, #tpu.memory_space<vmem>>, %arg5: memref<32x32xf32, #tpu.memory_space<vmem>>, %arg6: memref<1x32xf32, #tpu.memory_space<vmem>>, %arg7: memref<32x32xf32, #tpu.memory_space<vmem>>, %arg8: memref<1x32xf32, #tpu.memory_space<vmem>>, %arg9: memref<1x16x32xf32, #tpu.memory_space<vmem>>, %arg10: memref<1x8x32xf32, #tpu.memory_space<vmem>>, %arg11: memref<1x2x8x16xf32, #tpu.memory_space<vmem>>, %arg12: memref<16x96xf32, #tpu.memory_space<vmem>>, %arg13: memref<8x96xf32, #tpu.memory_space<vmem>>, %arg14: memref<16x32xf32, #tpu.memory_space<vmem>>, %arg15: memref<8x32xf32, #tpu.memory_space<vmem>>) attributes {dimension_semantics = [#tpu.dimension_semantics<parallel>], iteration_bounds = array<i64: 2>, scalar_prefetch = 0 : i64, scratch_operands = 4 : i64, tpu.core_type = #tpu.core_type<tc>, window_params = [{transform_indices = @transform_0, window_bounds = array<i64: 1, 16, 32>}, {transform_indices = @transform_1, window_bounds = array<i64: 1, 8, 32>}, {pipeline_mode = #tpu.pipeline_mode<synchronous>, transform_indices = @transform_2, window_bounds = array<i64: 32, 96>}, {pipeline_mode = #tpu.pipeline_mode<synchronous>, transform_indices = @transform_3, window_bounds = array<i64: 32, 96>}, {pipeline_mode = #tpu.pipeline_mode<synchronous>, transform_indices = @transform_4, window_bounds = array<i64: 32, 32>}, {pipeline_mode = #tpu.pipeline_mode<synchronous>, transform_indices = @transform_5, window_bounds = array<i64: 1, 32>}, {pipeline_mode = #tpu.pipeline_mode<synchronous>, transform_indices = @transform_6, window_bounds = array<i64: 32, 32>}, {pipeline_mode = #tpu.pipeline_mode<synchronous>, transform_indices = @transform_7, window_bounds = array<i64: 1, 32>}, {transform_indices = @transform_8, window_bounds = array<i64: 1, 16, 32>}, {transform_indices = @transform_9, window_bounds = array<i64: 1, 8, 32>}, {transform_indices = @transform_10, window_bounds = array<i64: 1, 2, 8, 16>}]} {
    %c0 = arith.constant 0 : index
    %c0_0 = arith.constant 0 : index
    %c0_1 = arith.constant 0 : index
    %0 = vector.load %arg1[%c0, %c0_0, %c0_1] : memref<1x16x32xf32, #tpu.memory_space<vmem>>, vector<1x16x32xf32>
    %1 = vector.shape_cast %0 : vector<1x16x32xf32> to vector<16x32xf32>
    %c0_2 = arith.constant 0 : index
    %c0_3 = arith.constant 0 : index
    %c0_4 = arith.constant 0 : index
    %2 = vector.load %arg2[%c0_2, %c0_3, %c0_4] : memref<1x8x32xf32, #tpu.memory_space<vmem>>, vector<1x8x32xf32>
    %3 = vector.shape_cast %2 : vector<1x8x32xf32> to vector<8x32xf32>
    %c0_5 = arith.constant 0 : index
    %c0_6 = arith.constant 0 : index
    %4 = vector.load %arg3[%c0_5, %c0_6] : memref<32x96xf32, #tpu.memory_space<vmem>>, vector<32x96xf32>
    %cst = arith.constant dense<0.000000e+00> : vector<16x96xf32>
    %5 = tpu.matmul %1, %4, %cst {dimension_numbers = #tpu.dot_dimension_numbers<[1], [0], [0], [1], [0, 0, 1, 1], [], []>} : vector<16x32xf32>, vector<32x96xf32>, vector<16x96xf32> -> vector<16x96xf32>
    %c0_7 = arith.constant 0 : index
    %c0_8 = arith.constant 0 : index
    %6 = vector.load %arg12[%c0_7, %c0_8] : memref<16x96xf32, #tpu.memory_space<vmem>>, vector<16x96xf32>
    tpu.vector_store %arg12[%c0_7, %c0_8], %5 {strides = array<i32>} : memref<16x96xf32, #tpu.memory_space<vmem>>, vector<16x96xf32>,
    %c0_9 = arith.constant 0 : index
    %c0_10 = arith.constant 0 : index
    %7 = vector.load %arg4[%c0_9, %c0_10] : memref<32x96xf32, #tpu.memory_space<vmem>>, vector<32x96xf32>
    %cst_11 = arith.constant dense<0.000000e+00> : vector<8x96xf32>
    %8 = tpu.matmul %3, %7, %cst_11 {dimension_numbers = #tpu.dot_dimension_numbers<[1], [0], [0], [1], [0, 0, 1, 1], [], []>} : vector<8x32xf32>, vector<32x96xf32>, vector<8x96xf32> -> vector<8x96xf32>
    %c0_12 = arith.constant 0 : index
    %c0_13 = arith.constant 0 : index
    %9 = vector.load %arg13[%c0_12, %c0_13] : memref<8x96xf32, #tpu.memory_space<vmem>>, vector<8x96xf32>
    tpu.vector_store %arg13[%c0_12, %c0_13], %8 {strides = array<i32>} : memref<8x96xf32, #tpu.memory_space<vmem>>, vector<8x96xf32>,
    %cst_14 = arith.constant 0.000000e+00 : f32
    %10 = vector.broadcast %cst_14 : f32 to vector<16x32xf32>
    %c0_15 = arith.constant 0 : index
    %c0_16 = arith.constant 0 : index
    %11 = vector.load %arg14[%c0_15, %c0_16] : memref<16x32xf32, #tpu.memory_space<vmem>>, vector<16x32xf32>
    tpu.vector_store %arg14[%c0_15, %c0_16], %10 {strides = array<i32>} : memref<16x32xf32, #tpu.memory_space<vmem>>, vector<16x32xf32>,
    %cst_17 = arith.constant 0.000000e+00 : f32
    %12 = vector.broadcast %cst_17 : f32 to vector<8x32xf32>
    %c0_18 = arith.constant 0 : index
    %c0_19 = arith.constant 0 : index
    %13 = vector.load %arg15[%c0_18, %c0_19] : memref<8x32xf32, #tpu.memory_space<vmem>>, vector<8x32xf32>
    tpu.vector_store %arg15[%c0_18, %c0_19], %12 {strides = array<i32>} : memref<8x32xf32, #tpu.memory_space<vmem>>, vector<8x32xf32>,
    %c0_20 = arith.constant 0 : index
    %c0_21 = arith.constant 0 : index
    %14 = vector.load %arg12[%c0_20, %c0_21] : memref<16x96xf32, #tpu.memory_space<vmem>>, vector<16x16xf32>
    %c0_22 = arith.constant 0 : index
    %c32 = arith.constant 32 : index
    %15 = vector.load %arg12[%c0_22, %c32] : memref<16x96xf32, #tpu.memory_space<vmem>>, vector<16x16xf32>
    %c0_23 = arith.constant 0 : index
    %c64 = arith.constant 64 : index
    %16 = vector.load %arg12[%c0_23, %c64] : memref<16x96xf32, #tpu.memory_space<vmem>>, vector<16x16xf32>
    %c0_24 = arith.constant 0 : index
    %c0_25 = arith.constant 0 : index
    %17 = vector.load %arg13[%c0_24, %c0_25] : memref<8x96xf32, #tpu.memory_space<vmem>>, vector<8x16xf32>
    %c0_26 = arith.constant 0 : index
    %c32_27 = arith.constant 32 : index
    %18 = vector.load %arg13[%c0_26, %c32_27] : memref<8x96xf32, #tpu.memory_space<vmem>>, vector<8x16xf32>
    %c0_28 = arith.constant 0 : index
    %c64_29 = arith.constant 64 : index
    %19 = vector.load %arg13[%c0_28, %c64_29] : memref<8x96xf32, #tpu.memory_space<vmem>>, vector<8x16xf32>
    %cst_30 = arith.constant dense<0.000000e+00> : vector<16x8xf32>
    %20 = tpu.matmul %14, %18, %cst_30 {dimension_numbers = #tpu.dot_dimension_numbers<[1], [1], [0], [0], [0, 0, 1, 0], [], []>} : vector<16x16xf32>, vector<8x16xf32>, vector<16x8xf32> -> vector<16x8xf32>
    %cst_31 = arith.constant dense<0xFF800000> : vector<16xf32>
    %21 = vector.multi_reduction <maximumf>, %20, %cst_31 [1] : vector<16x8xf32> to vector<16xf32>
    %22 = vector.shape_cast %21 : vector<16xf32> to vector<16x1xf32>
    %23 = vector.broadcast %22 : vector<16x1xf32> to vector<16x8xf32>
    %24 = arith.subf %20, %23 : vector<16x8xf32>
    %25 = math.exp %24 : vector<16x8xf32>
    %cst_32 = arith.constant dense<0.000000e+00> : vector<16xf32>
    %26 = vector.multi_reduction <add>, %25, %cst_32 [1] : vector<16x8xf32> to vector<16xf32>
    %27 = vector.shape_cast %26 : vector<16xf32> to vector<16x1xf32>
    %28 = tpu.reciprocal %27 {approx = true} : vector<16x1xf32> -> vector<16x1xf32>
    %29 = vector.broadcast %28 : vector<16x1xf32> to vector<16x8xf32>
    %30 = arith.mulf %25, %29 : vector<16x8xf32>
    %cst_33 = arith.constant dense<0.000000e+00> : vector<16x16xf32>
    %31 = tpu.matmul %30, %19, %cst_33 {dimension_numbers = #tpu.dot_dimension_numbers<[1], [0], [0], [1], [0, 0, 1, 1], [], []>} : vector<16x8xf32>, vector<8x16xf32>, vector<16x16xf32> -> vector<16x16xf32>
    %c0_34 = arith.constant 0 : index
    %c0_35 = arith.constant 0 : index
    %32 = vector.load %arg14[%c0_34, %c0_35] : memref<16x32xf32, #tpu.memory_space<vmem>>, vector<16x32xf32>
    %c0_36 = arith.constant 0 : index
    %c0_37 = arith.constant 0 : index
    %33 = vector.load %arg5[%c0_36, %c0_37] : memref<32x32xf32, #tpu.memory_space<vmem>>, vector<16x32xf32>
    %cst_38 = arith.constant dense<0.000000e+00> : vector<16x32xf32>
    %34 = tpu.matmul %31, %33, %cst_38 {dimension_numbers = #tpu.dot_dimension_numbers<[1], [0], [0], [1], [0, 0, 1, 1], [], []>} : vector<16x16xf32>, vector<16x32xf32>, vector<16x32xf32> -> vector<16x32xf32>
    %35 = arith.addf %32, %34 : vector<16x32xf32>
    %c0_39 = arith.constant 0 : index
    %c0_40 = arith.constant 0 : index
    %36 = vector.load %arg14[%c0_39, %c0_40] : memref<16x32xf32, #tpu.memory_space<vmem>>, vector<16x32xf32>
    tpu.vector_store %arg14[%c0_39, %c0_40], %35 {strides = array<i32>} : memref<16x32xf32, #tpu.memory_space<vmem>>, vector<16x32xf32>,
    %cst_41 = arith.constant dense<0.000000e+00> : vector<8x16xf32>
    %37 = tpu.matmul %17, %15, %cst_41 {dimension_numbers = #tpu.dot_dimension_numbers<[1], [1], [0], [0], [0, 0, 1, 0], [], []>} : vector<8x16xf32>, vector<16x16xf32>, vector<8x16xf32> -> vector<8x16xf32>
    %cst_42 = arith.constant dense<0xFF800000> : vector<8xf32>
    %38 = vector.multi_reduction <maximumf>, %37, %cst_42 [1] : vector<8x16xf32> to vector<8xf32>
    %39 = vector.shape_cast %38 : vector<8xf32> to vector<8x1xf32>
    %40 = vector.broadcast %39 : vector<8x1xf32> to vector<8x16xf32>
    %41 = arith.subf %37, %40 : vector<8x16xf32>
    %42 = math.exp %41 : vector<8x16xf32>
    %cst_43 = arith.constant dense<0.000000e+00> : vector<8xf32>
    %43 = vector.multi_reduction <add>, %42, %cst_43 [1] : vector<8x16xf32> to vector<8xf32>
    %44 = vector.shape_cast %43 : vector<8xf32> to vector<8x1xf32>
    %45 = vector.broadcast %44 : vector<8x1xf32> to vector<8x16xf32>
    %46 = arith.divf %42, %45 : vector<8x16xf32>
    %c0_44 = arith.constant 0 : index
    %c0_45 = arith.constant 0 : index
    %c0_46 = arith.constant 0 : index
    %c0_47 = arith.constant 0 : index
    %47 = vector.load %arg11[%c0_44, %c0_45, %c0_46, %c0_47] : memref<1x2x8x16xf32, #tpu.memory_space<vmem>>, vector<1x1x8x16xf32>
    %48 = vector.shape_cast %47 : vector<1x1x8x16xf32> to vector<8x16xf32>
    %49 = vector.shape_cast %46 : vector<8x16xf32> to vector<1x1x8x16xf32>
    tpu.vector_store %arg11[%c0_44, %c0_45, %c0_46, %c0_47], %49 {strides = array<i32>} : memref<1x2x8x16xf32, #tpu.memory_space<vmem>>, vector<1x1x8x16xf32>,
    %cst_48 = arith.constant dense<0.000000e+00> : vector<8x16xf32>
    %50 = tpu.matmul %46, %16, %cst_48 {dimension_numbers = #tpu.dot_dimension_numbers<[1], [0], [0], [1], [0, 0, 1, 1], [], []>} : vector<8x16xf32>, vector<16x16xf32>, vector<8x16xf32> -> vector<8x16xf32>
    %c0_49 = arith.constant 0 : index
    %c0_50 = arith.constant 0 : index
    %51 = vector.load %arg15[%c0_49, %c0_50] : memref<8x32xf32, #tpu.memory_space<vmem>>, vector<8x32xf32>
    %c0_51 = arith.constant 0 : index
    %c0_52 = arith.constant 0 : index
    %52 = vector.load %arg7[%c0_51, %c0_52] : memref<32x32xf32, #tpu.memory_space<vmem>>, vector<16x32xf32>
    %cst_53 = arith.constant dense<0.000000e+00> : vector<8x32xf32>
    %53 = tpu.matmul %50, %52, %cst_53 {dimension_numbers = #tpu.dot_dimension_numbers<[1], [0], [0], [1], [0, 0, 1, 1], [], []>} : vector<8x16xf32>, vector<16x32xf32>, vector<8x32xf32> -> vector<8x32xf32>
    %54 = arith.addf %51, %53 : vector<8x32xf32>
    %c0_54 = arith.constant 0 : index
    %c0_55 = arith.constant 0 : index
    %55 = vector.load %arg15[%c0_54, %c0_55] : memref<8x32xf32, #tpu.memory_space<vmem>>, vector<8x32xf32>
    tpu.vector_store %arg15[%c0_54, %c0_55], %54 {strides = array<i32>} : memref<8x32xf32, #tpu.memory_space<vmem>>, vector<8x32xf32>,
    %c0_56 = arith.constant 0 : index
    %c16 = arith.constant 16 : index
    %56 = vector.load %arg12[%c0_56, %c16] : memref<16x96xf32, #tpu.memory_space<vmem>>, vector<16x16xf32>
    %c0_57 = arith.constant 0 : index
    %c48 = arith.constant 48 : index
    %57 = vector.load %arg12[%c0_57, %c48] : memref<16x96xf32, #tpu.memory_space<vmem>>, vector<16x16xf32>
    %c0_58 = arith.constant 0 : index
    %c80 = arith.constant 80 : index
    %58 = vector.load %arg12[%c0_58, %c80] : memref<16x96xf32, #tpu.memory_space<vmem>>, vector<16x16xf32>
    %c0_59 = arith.constant 0 : index
    %c16_60 = arith.constant 16 : index
    %59 = vector.load %arg13[%c0_59, %c16_60] : memref<8x96xf32, #tpu.memory_space<vmem>>, vector<8x16xf32>
    %c0_61 = arith.constant 0 : index
    %c48_62 = arith.constant 48 : index
    %60 = vector.load %arg13[%c0_61, %c48_62] : memref<8x96xf32, #tpu.memory_space<vmem>>, vector<8x16xf32>
    %c0_63 = arith.constant 0 : index
    %c80_64 = arith.constant 80 : index
    %61 = vector.load %arg13[%c0_63, %c80_64] : memref<8x96xf32, #tpu.memory_space<vmem>>, vector<8x16xf32>
    %cst_65 = arith.constant dense<0.000000e+00> : vector<16x8xf32>
    %62 = tpu.matmul %56, %60, %cst_65 {dimension_numbers = #tpu.dot_dimension_numbers<[1], [1], [0], [0], [0, 0, 1, 0], [], []>} : vector<16x16xf32>, vector<8x16xf32>, vector<16x8xf32> -> vector<16x8xf32>
    %cst_66 = arith.constant dense<0xFF800000> : vector<16xf32>
    %63 = vector.multi_reduction <maximumf>, %62, %cst_66 [1] : vector<16x8xf32> to vector<16xf32>
    %64 = vector.shape_cast %63 : vector<16xf32> to vector<16x1xf32>
    %65 = vector.broadcast %64 : vector<16x1xf32> to vector<16x8xf32>
    %66 = arith.subf %62, %65 : vector<16x8xf32>
    %67 = math.exp %66 : vector<16x8xf32>
    %cst_67 = arith.constant dense<0.000000e+00> : vector<16xf32>
    %68 = vector.multi_reduction <add>, %67, %cst_67 [1] : vector<16x8xf32> to vector<16xf32>
    %69 = vector.shape_cast %68 : vector<16xf32> to vector<16x1xf32>
    %70 = tpu.reciprocal %69 {approx = true} : vector<16x1xf32> -> vector<16x1xf32>
    %71 = vector.broadcast %70 : vector<16x1xf32> to vector<16x8xf32>
    %72 = arith.mulf %67, %71 : vector<16x8xf32>
    %cst_68 = arith.constant dense<0.000000e+00> : vector<16x16xf32>
    %73 = tpu.matmul %72, %61, %cst_68 {dimension_numbers = #tpu.dot_dimension_numbers<[1], [0], [0], [1], [0, 0, 1, 1], [], []>} : vector<16x8xf32>, vector<8x16xf32>, vector<16x16xf32> -> vector<16x16xf32>
    %c0_69 = arith.constant 0 : index
    %c0_70 = arith.constant 0 : index
    %74 = vector.load %arg14[%c0_69, %c0_70] : memref<16x32xf32, #tpu.memory_space<vmem>>, vector<16x32xf32>
    %c16_71 = arith.constant 16 : index
    %c0_72 = arith.constant 0 : index
    %75 = vector.load %arg5[%c16_71, %c0_72] : memref<32x32xf32, #tpu.memory_space<vmem>>, vector<16x32xf32>
    %cst_73 = arith.constant dense<0.000000e+00> : vector<16x32xf32>
    %76 = tpu.matmul %73, %75, %cst_73 {dimension_numbers = #tpu.dot_dimension_numbers<[1], [0], [0], [1], [0, 0, 1, 1], [], []>} : vector<16x16xf32>, vector<16x32xf32>, vector<16x32xf32> -> vector<16x32xf32>
    %77 = arith.addf %74, %76 : vector<16x32xf32>
    %c0_74 = arith.constant 0 : index
    %c0_75 = arith.constant 0 : index
    %78 = vector.load %arg14[%c0_74, %c0_75] : memref<16x32xf32, #tpu.memory_space<vmem>>, vector<16x32xf32>
    tpu.vector_store %arg14[%c0_74, %c0_75], %77 {strides = array<i32>} : memref<16x32xf32, #tpu.memory_space<vmem>>, vector<16x32xf32>,
    %cst_76 = arith.constant dense<0.000000e+00> : vector<8x16xf32>
    %79 = tpu.matmul %59, %57, %cst_76 {dimension_numbers = #tpu.dot_dimension_numbers<[1], [1], [0], [0], [0, 0, 1, 0], [], []>} : vector<8x16xf32>, vector<16x16xf32>, vector<8x16xf32> -> vector<8x16xf32>
    %cst_77 = arith.constant dense<0xFF800000> : vector<8xf32>
    %80 = vector.multi_reduction <maximumf>, %79, %cst_77 [1] : vector<8x16xf32> to vector<8xf32>
    %81 = vector.shape_cast %80 : vector<8xf32> to vector<8x1xf32>
    %82 = vector.broadcast %81 : vector<8x1xf32> to vector<8x16xf32>
    %83 = arith.subf %79, %82 : vector<8x16xf32>
    %84 = math.exp %83 : vector<8x16xf32>
    %cst_78 = arith.constant dense<0.000000e+00> : vector<8xf32>
    %85 = vector.multi_reduction <add>, %84, %cst_78 [1] : vector<8x16xf32> to vector<8xf32>
    %86 = vector.shape_cast %85 : vector<8xf32> to vector<8x1xf32>
    %87 = vector.broadcast %86 : vector<8x1xf32> to vector<8x16xf32>
    %88 = arith.divf %84, %87 : vector<8x16xf32>
    %c0_79 = arith.constant 0 : index
    %c1 = arith.constant 1 : index
    %c0_80 = arith.constant 0 : index
    %c0_81 = arith.constant 0 : index
    %89 = vector.load %arg11[%c0_79, %c1, %c0_80, %c0_81] : memref<1x2x8x16xf32, #tpu.memory_space<vmem>>, vector<1x1x8x16xf32>
    %90 = vector.shape_cast %89 : vector<1x1x8x16xf32> to vector<8x16xf32>
    %91 = vector.shape_cast %88 : vector<8x16xf32> to vector<1x1x8x16xf32>
    tpu.vector_store %arg11[%c0_79, %c1, %c0_80, %c0_81], %91 {strides = array<i32>} : memref<1x2x8x16xf32, #tpu.memory_space<vmem>>, vector<1x1x8x16xf32>,
    %cst_82 = arith.constant dense<0.000000e+00> : vector<8x16xf32>
    %92 = tpu.matmul %88, %58, %cst_82 {dimension_numbers = #tpu.dot_dimension_numbers<[1], [0], [0], [1], [0, 0, 1, 1], [], []>} : vector<8x16xf32>, vector<16x16xf32>, vector<8x16xf32> -> vector<8x16xf32>
    %c0_83 = arith.constant 0 : index
    %c0_84 = arith.constant 0 : index
    %93 = vector.load %arg15[%c0_83, %c0_84] : memref<8x32xf32, #tpu.memory_space<vmem>>, vector<8x32xf32>
    %c16_85 = arith.constant 16 : index
    %c0_86 = arith.constant 0 : index
    %94 = vector.load %arg7[%c16_85, %c0_86] : memref<32x32xf32, #tpu.memory_space<vmem>>, vector<16x32xf32>
    %cst_87 = arith.constant dense<0.000000e+00> : vector<8x32xf32>
    %95 = tpu.matmul %92, %94, %cst_87 {dimension_numbers = #tpu.dot_dimension_numbers<[1], [0], [0], [1], [0, 0, 1, 1], [], []>} : vector<8x16xf32>, vector<16x32xf32>, vector<8x32xf32> -> vector<8x32xf32>
    %96 = arith.addf %93, %95 : vector<8x32xf32>
    %c0_88 = arith.constant 0 : index
    %c0_89 = arith.constant 0 : index
    %97 = vector.load %arg15[%c0_88, %c0_89] : memref<8x32xf32, #tpu.memory_space<vmem>>, vector<8x32xf32>
    tpu.vector_store %arg15[%c0_88, %c0_89], %96 {strides = array<i32>} : memref<8x32xf32, #tpu.memory_space<vmem>>, vector<8x32xf32>,
    %c0_90 = arith.constant 0 : index
    %c0_91 = arith.constant 0 : index
    %98 = vector.load %arg14[%c0_90, %c0_91] : memref<16x32xf32, #tpu.memory_space<vmem>>, vector<16x32xf32>
    %c0_92 = arith.constant 0 : index
    %c0_93 = arith.constant 0 : index
    %99 = vector.load %arg6[%c0_92, %c0_93] : memref<1x32xf32, #tpu.memory_space<vmem>>, vector<1x32xf32>
    %100 = vector.broadcast %99 : vector<1x32xf32> to vector<16x32xf32>
    %101 = arith.addf %98, %100 : vector<16x32xf32>
    %c0_94 = arith.constant 0 : index
    %c0_95 = arith.constant 0 : index
    %c0_96 = arith.constant 0 : index
    %102 = vector.load %arg9[%c0_94, %c0_95, %c0_96] : memref<1x16x32xf32, #tpu.memory_space<vmem>>, vector<1x16x32xf32>
    %103 = vector.shape_cast %102 : vector<1x16x32xf32> to vector<16x32xf32>
    %104 = vector.shape_cast %101 : vector<16x32xf32> to vector<1x16x32xf32>
    tpu.vector_store %arg9[%c0_94, %c0_95, %c0_96], %104 {strides = array<i32>} : memref<1x16x32xf32, #tpu.memory_space<vmem>>, vector<1x16x32xf32>,
    %c0_97 = arith.constant 0 : index
    %c0_98 = arith.constant 0 : index
    %105 = vector.load %arg15[%c0_97, %c0_98] : memref<8x32xf32, #tpu.memory_space<vmem>>, vector<8x32xf32>
    %c0_99 = arith.constant 0 : index
    %c0_100 = arith.constant 0 : index
    %106 = vector.load %arg8[%c0_99, %c0_100] : memref<1x32xf32, #tpu.memory_space<vmem>>, vector<1x32xf32>
    %107 = vector.broadcast %106 : vector<1x32xf32> to vector<8x32xf32>
    %108 = arith.addf %105, %107 : vector<8x32xf32>
    %c0_101 = arith.constant 0 : index
    %c0_102 = arith.constant 0 : index
    %c0_103 = arith.constant 0 : index
    %109 = vector.load %arg10[%c0_101, %c0_102, %c0_103] : memref<1x8x32xf32, #tpu.memory_space<vmem>>, vector<1x8x32xf32>
    %110 = vector.shape_cast %109 : vector<1x8x32xf32> to vector<8x32xf32>
    %111 = vector.shape_cast %108 : vector<8x32xf32> to vector<1x8x32xf32>
    tpu.vector_store %arg10[%c0_101, %c0_102, %c0_103], %111 {strides = array<i32>} : memref<1x8x32xf32, #tpu.memory_space<vmem>>, vector<1x8x32xf32>,
    return
  }
  func.func @transform_0(%arg0: i32) -> (i32, i32, i32) {
    %c0_i32 = arith.constant 0 : i32
    %c0_i32_0 = arith.constant 0 : i32
    %c0_i32_1 = arith.constant 0 : i32
    return %arg0, %c0_i32, %c0_i32_0 : i32, i32, i32
  }
  func.func @transform_1(%arg0: i32) -> (i32, i32, i32) {
    %c0_i32 = arith.constant 0 : i32
    %c0_i32_0 = arith.constant 0 : i32
    %c0_i32_1 = arith.constant 0 : i32
    return %arg0, %c0_i32, %c0_i32_0 : i32, i32, i32
  }
  func.func @transform_2(%arg0: i32) -> (i32, i32) {
    %c0_i32 = arith.constant 0 : i32
    %c0_i32_0 = arith.constant 0 : i32
    %c0_i32_1 = arith.constant 0 : i32
    return %c0_i32, %c0_i32_0 : i32, i32
  }
  func.func @transform_3(%arg0: i32) -> (i32, i32) {
    %c0_i32 = arith.constant 0 : i32
    %c0_i32_0 = arith.constant 0 : i32
    %c0_i32_1 = arith.constant 0 : i32
    return %c0_i32, %c0_i32_0 : i32, i32
  }
  func.func @transform_4(%arg0: i32) -> (i32, i32) {
    %c0_i32 = arith.constant 0 : i32
    %c0_i32_0 = arith.constant 0 : i32
    %c0_i32_1 = arith.constant 0 : i32
    return %c0_i32, %c0_i32_0 : i32, i32
  }
  func.func @transform_5(%arg0: i32) -> (i32, i32) {
    %c0_i32 = arith.constant 0 : i32
    %c0_i32_0 = arith.constant 0 : i32
    %c0_i32_1 = arith.constant 0 : i32
    return %c0_i32, %c0_i32_0 : i32, i32
  }
  func.func @transform_6(%arg0: i32) -> (i32, i32) {
    %c0_i32 = arith.constant 0 : i32
    %c0_i32_0 = arith.constant 0 : i32
    %c0_i32_1 = arith.constant 0 : i32
    return %c0_i32, %c0_i32_0 : i32, i32
  }
  func.func @transform_7(%arg0: i32) -> (i32, i32) {
    %c0_i32 = arith.constant 0 : i32
    %c0_i32_0 = arith.constant 0 : i32
    %c0_i32_1 = arith.constant 0 : i32
    return %c0_i32, %c0_i32_0 : i32, i32
  }
  func.func @transform_8(%arg0: i32) -> (i32, i32, i32) {
    %c0_i32 = arith.constant 0 : i32
    %c0_i32_0 = arith.constant 0 : i32
    %c0_i32_1 = arith.constant 0 : i32
    return %arg0, %c0_i32, %c0_i32_0 : i32, i32, i32
  }
  func.func @transform_9(%arg0: i32) -> (i32, i32, i32) {
    %c0_i32 = arith.constant 0 : i32
    %c0_i32_0 = arith.constant 0 : i32
    %c0_i32_1 = arith.constant 0 : i32
    return %arg0, %c0_i32, %c0_i32_0 : i32, i32, i32
  }
  func.func @transform_10(%arg0: i32) -> (i32, i32, i32, i32) {
    %c0_i32 = arith.constant 0 : i32
    %c0_i32_0 = arith.constant 0 : i32
    %c0_i32_1 = arith.constant 0 : i32
    %c0_i32_2 = arith.constant 0 : i32
    return %arg0, %c0_i32, %c0_i32_0, %c0_i32_1 : i32, i32, i32, i32
  }
}

</mosaic_0001>

<llo_original>
// kernel: tpu_custom_call.1
$region0: #{tpu_custom_call.1}
  #allocation0 [shape = 'u32[]', space=smem, size = 0x4, offset = 0x4, fixed_abs, tag = 'smem constant byte address 0x4 - core index']
  #allocation1 [shape = 'u32[144,128]{1,0:T(1,128)}', space=vmem, size = 0x12000, scoped, tag = 'internal scratch']
  #allocation2 [shape = 'f32[16,96]{1,0:T(8,128)}', space=vmem, size = 0x2000, scoped, tag = 'scratch operand']
  #allocation3 [shape = 'f32[8,96]{1,0:T(8,128)}', space=vmem, size = 0x1000, scoped, tag = 'scratch operand']
  #allocation4 [shape = 'f32[16,32]{1,0:T(8,128)}', space=vmem, size = 0x2000, scoped, tag = 'scratch operand']
  #allocation5 [shape = 'f32[8,32]{1,0:T(8,128)}', space=vmem, size = 0x1000, scoped, tag = 'scratch operand']
  %s0 = inlined_call_operand.hbm [shape: f32[2,16,32], index: 0, kind: input, shape index: {}]
  %s1 = inlined_call_operand.hbm [shape: f32[2,8,32], index: 1, kind: input, shape index: {}]
  %s2 = inlined_call_operand.hbm [shape: f32[32,96], index: 2, kind: input, shape index: {}]
  %s3 = inlined_call_operand.hbm [shape: f32[32,96], index: 3, kind: input, shape index: {}]
  %s4 = inlined_call_operand.hbm [shape: f32[32,32], index: 4, kind: input, shape index: {}]
  %s5 = inlined_call_operand.vmem [shape: f32[1,32], index: 5, kind: input, shape index: {}]
  %s6 = inlined_call_operand.hbm [shape: f32[32,32], index: 6, kind: input, shape index: {}]
  %s7 = inlined_call_operand.vmem [shape: f32[1,32], index: 7, kind: input, shape index: {}]
  %s8 = inlined_call_operand.hbm [shape: f32[2,16,32], index: 8, kind: output, shape index: {0}]
  %s9 = inlined_call_operand.hbm [shape: f32[2,8,32], index: 9, kind: output, shape index: {1}]
  %s10 = inlined_call_operand.hbm [shape: f32[2,2,8,16], index: 10, kind: output, shape index: {2}]
  %11 = xla_tuple %s8, %s9, %s10
  %s12 = sld [smem:[#allocation0]]
  $region105: #{tpu_custom_call.1} parent=0
    _
  %s14 = ssub.s32 1, %s12
  %s15 = scalar_select 0, %s14, %s12
  $region1: #{tpu_custom_call.1} parent=0
    #allocation6 [shape = 'u8[16384]{0}', space=vmem, size = 0x4000, scoped, tag = 'input window, operand 0']
    #allocation7 [shape = 's32[2]{0}', space=sflag, size = 0x8, scoped, tag = 'scoped memory for tpu_custom_call.1']
    #allocation8 [shape = 's32[2]{0}', space=sflag, size = 0x8, scoped, tag = 'scoped memory for tpu_custom_call.1']
    #allocation9 [shape = 'u8[8192]{0}', space=vmem, size = 0x2000, scoped, tag = 'input window, operand 1']
    #allocation10 [shape = 's32[2]{0}', space=sflag, size = 0x8, scoped, tag = 'scoped memory for tpu_custom_call.1']
    #allocation11 [shape = 'u8[16384]{0}', space=vmem, size = 0x4000, scoped, tag = 'input window, operand 2, single buffered']
    #allocation12 [shape = 'u8[16384]{0}', space=vmem, size = 0x4000, scoped, tag = 'input window, operand 3, single buffered']
    #allocation13 [shape = 's32[1]{0}', space=sflag, size = 0x4, scoped, tag = 'scoped memory for tpu_custom_call.1']
    #allocation14 [shape = 'u8[16384]{0}', space=vmem, size = 0x4000, scoped, tag = 'input window, operand 4, single buffered']
    #allocation15 [shape = 'u8[16384]{0}', space=vmem, size = 0x4000, scoped, tag = 'input window, operand 6, single buffered']
    #allocation16 [shape = 's32[1]{0}', space=sflag, size = 0x4, scoped, tag = 'scoped memory for tpu_custom_call.1']
    #allocation17 [shape = 'u8[16384]{0}', space=vmem, size = 0x4000, scoped, tag = 'output window, operand 0']
    #allocation18 [shape = 'u8[8192]{0}', space=vmem, size = 0x2000, scoped, tag = 'output window, operand 1']
    #allocation19 [shape = 's32[2]{0}', space=sflag, size = 0x8, scoped, tag = 'scoped memory for tpu_custom_call.1']
    #allocation20 [shape = 'u8[16384]{0}', space=vmem, size = 0x4000, scoped, tag = 'output window, operand 2']
    %16 = vsyncpa [#allocation7], 0
    %s17 = scalar_lea.sflag [#allocation7], 1
    %18 = vsyncpa %s17, 0
    %19 = vsyncpa [#allocation10], 0
    %s20 = scalar_lea.sflag [#allocation10], 1
    %21 = vsyncpa %s20, 0
    %22 = vsyncpa [#allocation13], 0
    %23 = vsyncpa [#allocation16], 0
    %24 = vsyncpa [#allocation8], 0
    %s25 = scalar_lea.sflag [#allocation8], 1
    %26 = vsyncpa %s25, 0
    %27 = vsyncpa [#allocation19], 0
    %s28 = scalar_lea.sflag [#allocation19], 1
    %29 = vsyncpa %s28, 0
    loop: start=0, step=1, limit=4
    $region2: #{tpu_custom_call.1} parent=1 // loop_pre_header
      _
    $region3: #{tpu_custom_call.1} parent=1 // loop_header
      %s31 = sphi 0, %s35
      %p32 = scmp.ge.s32.totalorder %s31, 4
      %s41 = sphi 0, %s43
      %s44 = sphi 0, %s41
      %s45 = sphi 0, %s44
      %s61 = sphi 0, %s45
      %s67 = sphi 0, %s69
      %s70 = sphi 0, %s67
      %s71 = sphi 0, %s70
      %s87 = sphi 0, %s71
      %s91 = sphi 0, %s91
      %s93 = sphi 0, %s91
      %s94 = sphi 0, %s93
      %s108 = sphi 0, %s94
      %s112 = sphi 0, %s112
      %s114 = sphi 0, %s112
      %s115 = sphi 0, %s114
      %s129 = sphi 0, %s115
      %s133 = sphi 0, %s133
      %s135 = sphi 0, %s133
      %s136 = sphi 0, %s135
      %s150 = sphi 0, %s136
      %s154 = sphi 0, %s154
      %s156 = sphi 0, %s154
      %s157 = sphi 0, %s156
      %s171 = sphi 0, %s157
      %s175 = sphi 0, %s175
      %s177 = sphi 0, %s175
      %s178 = sphi 0, %s177
      %s192 = sphi 0, %s178
      %s196 = sphi 0, %s196
      %s198 = sphi 0, %s196
      %s199 = sphi 0, %s198
      %s213 = sphi 0, %s199
      %s219 = sphi 0, %s221
      %s222 = sphi 0, %s219
      %s223 = sphi 0, %s222
      %s239 = sphi 0, %s223
      %s245 = sphi 0, %s247
      %s248 = sphi 0, %s245
      %s249 = sphi 0, %s248
      %s265 = sphi 0, %s249
      %s271 = sphi 0, %s273
      %s274 = sphi 0, %s271
      %s275 = sphi 0, %s274
      %s291 = sphi 0, %s275
    $region4: #{tpu_custom_call.1} parent=1 // loop_header_branch
      %34 = sbr.rel (%p32) target = $region8
    $region5: #{tpu_custom_call.1} parent=1 // loop_body
      %s36 = ssub.s32 %s31, 1
      %s37 = ssub.s32 %s31, 2
      %s38 = sadd.s32 %s31, 1
      %s39 = ssub.s32 %s31, %s38
      %p40 = scmp.eq.s32.totalorder %s39, 0
      %s42 = sadd.s32 %s41, 1
      %s43 = scalar_select %p40, %s41, %s42
      %p46 = pneg %p40
      %p47 = scmp.eq.s32.totalorder %s31, 1
      %p48 = por %p46, %p47
      %p49 = scmp.ne.s32.totalorder %s41, %s44
      %p50 = scmp.eq.s32.totalorder %s31, 0
      %p51 = por %p49, %p50
      %p52 = scmp.ne.s32.totalorder %s41, %s44
      %p53 = scmp.eq.s32.totalorder %s36, 1
      %p54 = por %p52, %p53
      %p55 = scmp.ne.s32.totalorder %s44, %s45
      %p56 = scmp.eq.s32.totalorder %s36, 0
      %p57 = por %p55, %p56
      %p58 = scmp.ne.s32.totalorder %s44, %s45
      %p59 = scmp.eq.s32.totalorder %s37, 1
      %p60 = por %p58, %p59
      %p62 = scmp.ne.s32.totalorder %s45, %s61
      %p63 = scmp.eq.s32.totalorder %s37, 0
      %p64 = por %p62, %p63
      %s65 = ssub.s32 %s31, %s38
      %p66 = scmp.eq.s32.totalorder %s65, 0
      %s68 = sadd.s32 %s67, 1
      %s69 = scalar_select %p66, %s67, %s68
      %p72 = pneg %p66
      %p73 = scmp.eq.s32.totalorder %s31, 1
      %p74 = por %p72, %p73
      %p75 = scmp.ne.s32.totalorder %s67, %s70
      %p76 = scmp.eq.s32.totalorder %s31, 0
      %p77 = por %p75, %p76
      %p78 = scmp.ne.s32.totalorder %s67, %s70
      %p79 = scmp.eq.s32.totalorder %s36, 1
      %p80 = por %p78, %p79
      %p81 = scmp.ne.s32.totalorder %s70, %s71
      %p82 = scmp.eq.s32.totalorder %s36, 0
      %p83 = por %p81, %p82
      %p84 = scmp.ne.s32.totalorder %s70, %s71
      %p85 = scmp.eq.s32.totalorder %s37, 1
      %p86 = por %p84, %p85
      %p88 = scmp.ne.s32.totalorder %s71, %s87
      %p89 = scmp.eq.s32.totalorder %s37, 0
      %p90 = por %p88, %p89
      %s92 = sadd.s32 %s91, 1
      %p95 = scmp.eq.s32.totalorder %s31, 1
      %p96 = scmp.ne.s32.totalorder %s91, %s93
      %p97 = scmp.eq.s32.totalorder %s31, 0
      %p98 = por %p96, %p97
      %p99 = scmp.ne.s32.totalorder %s91, %s93
      %p100 = scmp.eq.s32.totalorder %s36, 1
      %p101 = por %p99, %p100
      %p102 = scmp.ne.s32.totalorder %s93, %s94
      %p103 = scmp.eq.s32.totalorder %s36, 0
      %p104 = por %p102, %p103
      %p105 = scmp.ne.s32.totalorder %s93, %s94
      %p106 = scmp.eq.s32.totalorder %s37, 1
      %p107 = por %p105, %p106
      %p109 = scmp.ne.s32.totalorder %s94, %s108
      %p110 = scmp.eq.s32.totalorder %s37, 0
      %p111 = por %p109, %p110
      %s113 = sadd.s32 %s112, 1
      %p116 = scmp.eq.s32.totalorder %s31, 1
      %p117 = scmp.ne.s32.totalorder %s112, %s114
      %p118 = scmp.eq.s32.totalorder %s31, 0
      %p119 = por %p117, %p118
      %p120 = scmp.ne.s32.totalorder %s112, %s114
      %p121 = scmp.eq.s32.totalorder %s36, 1
      %p122 = por %p120, %p121
      %p123 = scmp.ne.s32.totalorder %s114, %s115
      %p124 = scmp.eq.s32.totalorder %s36, 0
      %p125 = por %p123, %p124
      %p126 = scmp.ne.s32.totalorder %s114, %s115
      %p127 = scmp.eq.s32.totalorder %s37, 1
      %p128 = por %p126, %p127
      %p130 = scmp.ne.s32.totalorder %s115, %s129
      %p131 = scmp.eq.s32.totalorder %s37, 0
      %p132 = por %p130, %p131
      %s134 = sadd.s32 %s133, 1
      %p137 = scmp.eq.s32.totalorder %s31, 1
      %p138 = scmp.ne.s32.totalorder %s133, %s135
      %p139 = scmp.eq.s32.totalorder %s31, 0
      %p140 = por %p138, %p139
      %p141 = scmp.ne.s32.totalorder %s133, %s135
      %p142 = scmp.eq.s32.totalorder %s36, 1
      %p143 = por %p141, %p142
      %p144 = scmp.ne.s32.totalorder %s135, %s136
      %p145 = scmp.eq.s32.totalorder %s36, 0
      %p146 = por %p144, %p145
      %p147 = scmp.ne.s32.totalorder %s135, %s136
      %p148 = scmp.eq.s32.totalorder %s37, 1
      %p149 = por %p147, %p148
      %p151 = scmp.ne.s32.totalorder %s136, %s150
      %p152 = scmp.eq.s32.totalorder %s37, 0
      %p153 = por %p151, %p152
      %s155 = sadd.s32 %s154, 1
      %p158 = scmp.eq.s32.totalorder %s31, 1
      %p159 = scmp.ne.s32.totalorder %s154, %s156
      %p160 = scmp.eq.s32.totalorder %s31, 0
      %p161 = por %p159, %p160
      %p162 = scmp.ne.s32.totalorder %s154, %s156
      %p163 = scmp.eq.s32.totalorder %s36, 1
      %p164 = por %p162, %p163
      %p165 = scmp.ne.s32.totalorder %s156, %s157
      %p166 = scmp.eq.s32.totalorder %s36, 0
      %p167 = por %p165, %p166
      %p168 = scmp.ne.s32.totalorder %s156, %s157
      %p169 = scmp.eq.s32.totalorder %s37, 1
      %p170 = por %p168, %p169
      %p172 = scmp.ne.s32.totalorder %s157, %s171
      %p173 = scmp.eq.s32.totalorder %s37, 0
      %p174 = por %p172, %p173
      %s176 = sadd.s32 %s175, 1
      %p179 = scmp.eq.s32.totalorder %s31, 1
      %p180 = scmp.ne.s32.totalorder %s175, %s177
      %p181 = scmp.eq.s32.totalorder %s31, 0
      %p182 = por %p180, %p181
      %p183 = scmp.ne.s32.totalorder %s175, %s177
      %p184 = scmp.eq.s32.totalorder %s36, 1
      %p185 = por %p183, %p184
      %p186 = scmp.ne.s32.totalorder %s177, %s178
      %p187 = scmp.eq.s32.totalorder %s36, 0
      %p188 = por %p186, %p187
      %p189 = scmp.ne.s32.totalorder %s177, %s178
      %p190 = scmp.eq.s32.totalorder %s37, 1
      %p191 = por %p189, %p190
      %p193 = scmp.ne.s32.totalorder %s178, %s192
      %p194 = scmp.eq.s32.totalorder %s37, 0
      %p195 = por %p193, %p194
      %s197 = sadd.s32 %s196, 1
      %p200 = scmp.eq.s32.totalorder %s31, 1
      %p201 = scmp.ne.s32.totalorder %s196, %s198
      %p202 = scmp.eq.s32.totalorder %s31, 0
      %p203 = por %p201, %p202
      %p204 = scmp.ne.s32.totalorder %s196, %s198
      %p205 = scmp.eq.s32.totalorder %s36, 1
      %p206 = por %p204, %p205
      %p207 = scmp.ne.s32.totalorder %s198, %s199
      %p208 = scmp.eq.s32.totalorder %s36, 0
      %p209 = por %p207, %p208
      %p210 = scmp.ne.s32.totalorder %s198, %s199
      %p211 = scmp.eq.s32.totalorder %s37, 1
      %p212 = por %p210, %p211
      %p214 = scmp.ne.s32.totalorder %s199, %s213
      %p215 = scmp.eq.s32.totalorder %s37, 0
      %p216 = por %p214, %p215
      %s217 = ssub.s32 %s31, %s38
      %p218 = scmp.eq.s32.totalorder %s217, 0
      %s220 = sadd.s32 %s219, 1
      %s221 = scalar_select %p218, %s219, %s220
      %p224 = pneg %p218
      %p225 = scmp.eq.s32.totalorder %s31, 1
      %p226 = por %p224, %p225
      %p227 = scmp.ne.s32.totalorder %s219, %s222
      %p228 = scmp.eq.s32.totalorder %s31, 0
      %p229 = por %p227, %p228
      %p230 = scmp.ne.s32.totalorder %s219, %s222
      %p231 = scmp.eq.s32.totalorder %s36, 1
      %p232 = por %p230, %p231
      %p233 = scmp.ne.s32.totalorder %s222, %s223
      %p234 = scmp.eq.s32.totalorder %s36, 0
      %p235 = por %p233, %p234
      %p236 = scmp.ne.s32.totalorder %s222, %s223
      %p237 = scmp.eq.s32.totalorder %s37, 1
      %p238 = por %p236, %p237
      %p240 = scmp.ne.s32.totalorder %s223, %s239
      %p241 = scmp.eq.s32.totalorder %s37, 0
      %p242 = por %p240, %p241
      %s243 = ssub.s32 %s31, %s38
      %p244 = scmp.eq.s32.totalorder %s243, 0
      %s246 = sadd.s32 %s245, 1
      %s247 = scalar_select %p244, %s245, %s246
      %p250 = pneg %p244
      %p251 = scmp.eq.s32.totalorder %s31, 1
      %p252 = por %p250, %p251
      %p253 = scmp.ne.s32.totalorder %s245, %s248
      %p254 = scmp.eq.s32.totalorder %s31, 0
      %p255 = por %p253, %p254
      %p256 = scmp.ne.s32.totalorder %s245, %s248
      %p257 = scmp.eq.s32.totalorder %s36, 1
      %p258 = por %p256, %p257
      %p259 = scmp.ne.s32.totalorder %s248, %s249
      %p260 = scmp.eq.s32.totalorder %s36, 0
      %p261 = por %p259, %p260
      %p262 = scmp.ne.s32.totalorder %s248, %s249
      %p263 = scmp.eq.s32.totalorder %s37, 1
      %p264 = por %p262, %p263
      %p266 = scmp.ne.s32.totalorder %s249, %s265
      %p267 = scmp.eq.s32.totalorder %s37, 0
      %p268 = por %p266, %p267
      %s269 = ssub.s32 %s31, %s38
      %p270 = scmp.eq.s32.totalorder %s269, 0
      %s272 = sadd.s32 %s271, 1
      %s273 = scalar_select %p270, %s271, %s272
      %p276 = pneg %p270
      %p277 = scmp.eq.s32.totalorder %s31, 1
      %p278 = por %p276, %p277
      %p279 = scmp.ne.s32.totalorder %s271, %s274
      %p280 = scmp.eq.s32.totalorder %s31, 0
      %p281 = por %p279, %p280
      %p282 = scmp.ne.s32.totalorder %s271, %s274
      %p283 = scmp.eq.s32.totalorder %s36, 1
      %p284 = por %p282, %p283
      %p285 = scmp.ne.s32.totalorder %s274, %s275
      %p286 = scmp.eq.s32.totalorder %s36, 0
      %p287 = por %p285, %p286
      %p288 = scmp.ne.s32.totalorder %s274, %s275
      %p289 = scmp.eq.s32.totalorder %s37, 1
      %p290 = por %p288, %p289
      %p292 = scmp.ne.s32.totalorder %s275, %s291
      %p293 = scmp.eq.s32.totalorder %s37, 0
      %p294 = por %p292, %p293
      %p295 = scmp.le.s32.totalorder 1, %s31
      %p296 = scmp.lt.s32.totalorder %s31, 3
      %p297 = pnand %p295, %p296
      %p298 = pneg %p297
      // Predicated region
      $region9: #{tpu_custom_call.1} parent=5 // pred_check
        _
      $region10: #{tpu_custom_call.1} parent=5 // pred_check_branch
        %300 = sbr.rel (%p297) target = $region12
      $region11: #{tpu_custom_call.1} parent=5 // pred_region
        %s301 = ssub.s32 %s31, 1
        // Predicated region
        $region13: #{tpu_custom_call.1} parent=11 // pred_check
          %p302 = pneg %p104
        $region14: #{tpu_custom_call.1} parent=11 // pred_check_branch
          %304 = sbr.rel (%p302) target = $region16
        $region15: #{tpu_custom_call.1} parent=11 // pred_region
          %s306 = ssub.s32 512, 512
          %307 = vsyncadd [#allocation10], %s306
          %s308 = sshll.u32 [#allocation11], 4
          %s309 = int_to_ptr.vmem [resolvable:$true] %s308
          %314 = dma.hbm_to_vmem [thread:$0]  %s2, 512, %s309, [#allocation10], 128, 128, 8
        $region16: #{tpu_custom_call.1} parent=11 // pred_fallthru
          _
        // Predicated region
        $region17: #{tpu_custom_call.1} parent=11 // pred_check
          %p315 = pneg %p125
        $region18: #{tpu_custom_call.1} parent=11 // pred_check_branch
          %317 = sbr.rel (%p315) target = $region20
        $region19: #{tpu_custom_call.1} parent=11 // pred_region
          %s319 = ssub.s32 512, 512
          %320 = vsyncadd [#allocation13], %s319
          %s321 = sshll.u32 [#allocation12], 4
          %s322 = int_to_ptr.vmem [resolvable:$true] %s321
          %327 = dma.hbm_to_vmem [thread:$0]  %s3, 512, %s322, [#allocation13], 128, 128, 8
        $region20: #{tpu_custom_call.1} parent=11 // pred_fallthru
          _
        // Predicated region
        $region21: #{tpu_custom_call.1} parent=11 // pred_check
          %p328 = pneg %p146
        $region22: #{tpu_custom_call.1} parent=11 // pred_check_branch
          %330 = sbr.rel (%p328) target = $region24
        $region23: #{tpu_custom_call.1} parent=11 // pred_region
          %s332 = ssub.s32 512, 512
          %333 = vsyncadd [#allocation13], %s332
          %s334 = sshll.u32 [#allocation14], 4
          %s335 = int_to_ptr.vmem [resolvable:$true] %s334
          %340 = dma.hbm_to_vmem [thread:$0]  %s4, 512, %s335, [#allocation13], 128, 128, 8
        $region24: #{tpu_custom_call.1} parent=11 // pred_fallthru
          _
        // Predicated region
        $region25: #{tpu_custom_call.1} parent=11 // pred_check
          %p341 = pneg %p167
        $region26: #{tpu_custom_call.1} parent=11 // pred_check_branch
          %343 = sbr.rel (%p341) target = $region28
        $region27: #{tpu_custom_call.1} parent=11 // pred_region
          _
        $region28: #{tpu_custom_call.1} parent=11 // pred_fallthru
          _
        // Predicated region
        $region29: #{tpu_custom_call.1} parent=11 // pred_check
          %p344 = pneg %p188
        $region30: #{tpu_custom_call.1} parent=11 // pred_check_branch
          %346 = sbr.rel (%p344) target = $region32
        $region31: #{tpu_custom_call.1} parent=11 // pred_region
          %s348 = ssub.s32 512, 512
          %349 = vsyncadd [#allocation16], %s348
          %s350 = sshll.u32 [#allocation15], 4
          %s351 = int_to_ptr.vmem [resolvable:$true] %s350
          %356 = dma.hbm_to_vmem [thread:$0]  %s6, 512, %s351, [#allocation16], 128, 128, 8
        $region32: #{tpu_custom_call.1} parent=11 // pred_fallthru
          _
        // Predicated region
        $region33: #{tpu_custom_call.1} parent=11 // pred_check
          %p357 = pneg %p209
        $region34: #{tpu_custom_call.1} parent=11 // pred_check_branch
          %359 = sbr.rel (%p357) target = $region36
        $region35: #{tpu_custom_call.1} parent=11 // pred_region
          _
        $region36: #{tpu_custom_call.1} parent=11 // pred_fallthru
          _
      $region12: #{tpu_custom_call.1} parent=5 // pred_fallthru
        _
      %p360 = scmp.lt.s32.totalorder %s31, 2
      // Predicated region
      $region37: #{tpu_custom_call.1} parent=5 // pred_check
        %p361 = pneg %p360
      $region38: #{tpu_custom_call.1} parent=5 // pred_check_branch
        %363 = sbr.rel (%p361) target = $region40
      $region39: #{tpu_custom_call.1} parent=5 // pred_region
        // Predicated region
        $region41: #{tpu_custom_call.1} parent=39 // pred_check
          %p364 = pneg %p51
        $region42: #{tpu_custom_call.1} parent=39 // pred_check_branch
          %366 = sbr.rel (%p364) target = $region44
        $region43: #{tpu_custom_call.1} parent=39 // pred_region
          %s367 = sand.u32 %s41, 1
          %s368 = scalar_lea.sflag [#allocation7], %s367
          %s369 = sand.u32 %s41, 1
          %s370 = smul.addr %s369, 16
          %s371 = scalar_lea.vmem [#allocation6], %s370
          %s373 = ssub.s32 256, 256
          %374 = vsyncadd %s368, %s373
          %s375 = smul.addr %s31, 2
          %s376 = smul.addr %s375, 128
          %s377 = scalar_lea.hbm %s0, %s376
          %s378 = sshll.u32 %s371, 4
          %s379 = int_to_ptr.vmem [resolvable:$true] %s378
          %384 = dma.hbm_to_vmem [thread:$0]  %s377, 256, %s379, %s368, 128, 128, 8
        $region44: #{tpu_custom_call.1} parent=39 // pred_fallthru
          _
        // Predicated region
        $region45: #{tpu_custom_call.1} parent=39 // pred_check
          %p385 = pneg %p77
        $region46: #{tpu_custom_call.1} parent=39 // pred_check_branch
          %387 = sbr.rel (%p385) target = $region48
        $region47: #{tpu_custom_call.1} parent=39 // pred_region
          %s388 = sand.u32 %s31, 1
          %s389 = scalar_lea.sflag [#allocation10], %s388
          %s390 = sand.u32 %s67, 1
          %s391 = smul.addr %s390, 8
          %s392 = scalar_lea.vmem [#allocation9], %s391
          %s394 = ssub.s32 128, 128
          %395 = vsyncadd %s389, %s394
          %s396 = smul.addr %s31, 128
          %s397 = scalar_lea.hbm %s1, %s396
          %s399 = sshll.u32 %s392, 4
          %s400 = int_to_ptr.vmem [resolvable:$true] %s399
          %402 = dma.hbm_to_vmem [thread:$0]  %s397, 128, %s400, %s389
        $region48: #{tpu_custom_call.1} parent=39 // pred_fallthru
          _
      $region40: #{tpu_custom_call.1} parent=5 // pred_fallthru
        _
      %p403 = scmp.le.s32.totalorder 1, %s31
      %p404 = scmp.lt.s32.totalorder %s31, 3
      %p405 = pnand %p403, %p404
      %p406 = pneg %p405
      // Predicated region
      $region49: #{tpu_custom_call.1} parent=5 // pred_check
        _
      $region50: #{tpu_custom_call.1} parent=5 // pred_check_branch
        %408 = sbr.rel (%p405) target = $region52
      $region51: #{tpu_custom_call.1} parent=5 // pred_region
        %s409 = ssub.s32 %s31, 1
        %s410 = sand.u32 %s44, 1
        %s411 = scalar_lea.sflag [#allocation7], %s410
        %s412 = sand.u32 %s44, 1
        %s413 = smul.addr %s412, 16
        %s414 = scalar_lea.vmem [#allocation6], %s413
        // Predicated region
        $region53: #{tpu_custom_call.1} parent=51 // pred_check
          %p415 = pneg %p57
        $region54: #{tpu_custom_call.1} parent=51 // pred_check_branch
          %417 = sbr.rel (%p415) target = $region56
        $region55: #{tpu_custom_call.1} parent=51 // pred_region
          %418 = dma.done %s411, 256
        $region56: #{tpu_custom_call.1} parent=51 // pred_fallthru
          _
        %s419 = sand.u32 %s36, 1
        %s420 = scalar_lea.sflag [#allocation10], %s419
        %s421 = sand.u32 %s70, 1
        %s422 = smul.addr %s421, 8
        %s423 = scalar_lea.vmem [#allocation9], %s422
        // Predicated region
        $region57: #{tpu_custom_call.1} parent=51 // pred_check
          %p424 = pneg %p83
        $region58: #{tpu_custom_call.1} parent=51 // pred_check_branch
          %426 = sbr.rel (%p424) target = $region60
        $region59: #{tpu_custom_call.1} parent=51 // pred_region
          %427 = dma.done %s420, 128
        $region60: #{tpu_custom_call.1} parent=51 // pred_fallthru
          _
        // Predicated region
        $region61: #{tpu_custom_call.1} parent=51 // pred_check
          %p428 = pneg %p104
        $region62: #{tpu_custom_call.1} parent=51 // pred_check_branch
          %430 = sbr.rel (%p428) target = $region64
        $region63: #{tpu_custom_call.1} parent=51 // pred_region
          %431 = dma.done [#allocation10], 512
        $region64: #{tpu_custom_call.1} parent=51 // pred_fallthru
          _
        // Predicated region
        $region65: #{tpu_custom_call.1} parent=51 // pred_check
          %p432 = pneg %p125
        $region66: #{tpu_custom_call.1} parent=51 // pred_check_branch
          %434 = sbr.rel (%p432) target = $region68
        $region67: #{tpu_custom_call.1} parent=51 // pred_region
          %435 = dma.done [#allocation13], 512
        $region68: #{tpu_custom_call.1} parent=51 // pred_fallthru
          _
        // Predicated region
        $region69: #{tpu_custom_call.1} parent=51 // pred_check
          %p436 = pneg %p146
        $region70: #{tpu_custom_call.1} parent=51 // pred_check_branch
          %438 = sbr.rel (%p436) target = $region72
        $region71: #{tpu_custom_call.1} parent=51 // pred_region
          %439 = dma.done [#allocation13], 512
        $region72: #{tpu_custom_call.1} parent=51 // pred_fallthru
          _
        // Predicated region
        $region73: #{tpu_custom_call.1} parent=51 // pred_check
          %p440 = pneg %p188
        $region74: #{tpu_custom_call.1} parent=51 // pred_check_branch
          %442 = sbr.rel (%p440) target = $region76
        $region75: #{tpu_custom_call.1} parent=51 // pred_region
          %443 = dma.done [#allocation16], 512
        $region76: #{tpu_custom_call.1} parent=51 // pred_fallthru
          _
        %s444 = sand.u32 %s44, 1
        %s445 = scalar_lea.sflag [#allocation7], %s444
        %s446 = sand.u32 %s44, 1
        %s447 = smul.addr %s446, 16
        %s448 = scalar_lea.vmem [#allocation6], %s447
        %p449 = pneg %p57
        %p450 = pneg %p54
        %s451 = sand.u32 %s36, 1
        %s452 = scalar_lea.sflag [#allocation10], %s451
        %s453 = sand.u32 %s70, 1
        %s454 = smul.addr %s453, 8
        %s455 = scalar_lea.vmem [#allocation9], %s454
        %p456 = pneg %p83
        %p457 = pneg %p80
        %p458 = pneg %p104
        %p459 = pneg %p101
        %p460 = pneg %p125
        %p461 = pneg %p122
        %p462 = pneg %p146
        %p463 = pneg %p143
        %p464 = pneg %p167
        %p465 = pneg %p164
        %p466 = pneg %p188
        %p467 = pneg %p185
        %p468 = pneg %p209
        %p469 = pneg %p206
        %p470 = pneg %p235
        %p471 = pneg %p232
        %s472 = sand.u32 %s222, 1
        %s473 = scalar_lea.sflag [#allocation8], %s472
        %s474 = sand.u32 %s222, 1
        %s475 = smul.addr %s474, 16
        %s476 = scalar_lea.vmem [#allocation17], %s475
        %p477 = pneg %p261
        %p478 = pneg %p258
        %s479 = sand.u32 %s36, 1
        %s480 = scalar_lea.sflag [#allocation19], %s479
        %s481 = sand.u32 %s248, 1
        %s482 = smul.addr %s481, 8
        %s483 = scalar_lea.vmem [#allocation18], %s482
        %p484 = pneg %p287
        %p485 = pneg %p284
        %s486 = sand.u32 %s36, 1
        %s487 = scalar_lea.sflag [#allocation19], %s486
        %s488 = sand.u32 %s274, 1
        %s489 = smul.addr %s488, 16
        %s490 = scalar_lea.vmem [#allocation20], %s489
        %v491 = vld [vmem:[%s414] sm:$0xff]
        %v492 = vld [vmem:[%s414 + $0x8] sm:$0xff]
        %v493 = vld [vmem:[%s423] sm:$0xff]
        %v494 = vld [vmem:[#allocation11] sm:$0xff]
        %v495 = vld [vmem:[#allocation11 + $0x8] sm:$0xff]
        %v496 = vld [vmem:[#allocation11 + $0x10] sm:$0xff]
        %v497 = vld [vmem:[#allocation11 + $0x18] sm:$0xff]
        %vm498 = vcmask 261120
        %v500 = vsel %vm498, %v491, 0
        %v503 = vsel %vm498, %v492, 0
        %505 = vmatprep.subr.mxu0 0.0
        %506 = vmatpush1.msra.mxu0 %v494
        %507 = vmatprep.subr.mxu0 0.0
        %508 = vmatpush1.msra.mxu0 %v495
        %509 = vmatprep.subr.mxu0 0.0
        %510 = vmatpush1.msra.mxu0 %v496
        %511 = vmatprep.subr.mxu0 0.0
        %512 = vmatpush1.msra.mxu0 %v497
        %513 = vmatprep.subr.mxu0 0.0
        %514 = vmatpush1.msra.mxu0 0.0
        %515 = vmatprep.subr.mxu0 0.0
        %516 = vmatpush1.msra.mxu0 0.0
        %517 = vmatprep.subr.mxu0 0.0
        %518 = vmatpush1.msra.mxu0 0.0
        %519 = vmatprep.subr.mxu0 0.0
        %520 = vmatpush1.msra.mxu0 0.0
        %521 = vmatprep.subr.mxu0 0.0
        %522 = vmatpush1.msra.mxu0 0.0
        %523 = vmatprep.subr.mxu0 0.0
        %524 = vmatpush1.msra.mxu0 0.0
        %525 = vmatprep.subr.mxu0 0.0
        %526 = vmatpush1.msra.mxu0 0.0
        %527 = vmatprep.subr.mxu0 0.0
        %528 = vmatpush1.msra.mxu0 0.0
        %529 = vmatprep.subr.mxu0 0.0
        %530 = vmatpush1.msra.mxu0 0.0
        %531 = vmatprep.subr.mxu0 0.0
        %532 = vmatpush1.msra.mxu0 0.0
        %533 = vmatprep.subr.mxu0 0.0
        %534 = vmatpush1.msra.mxu0 0.0
        %535 = vmatprep.subr.mxu0 0.0
        %536 = vmatpush1.msra.mxu0 0.0
        %537 = vmatprep.subr.mxu0 0.0
        %538 = vmatpush1.msra.mxu0 0.0
        %539 = vmatprep.subr.mxu0 0.0
        %540 = vmatpush1.msra.mxu0 0.0
        %541 = vmatprep.subr.mxu0 0.0
        %542 = vmatpush1.msra.mxu0 0.0
        %543 = vmatprep.subr.mxu0 0.0
        %544 = vmatpush1.msra.mxu0 0.0
        %545 = vmatprep.subr.mxu0 0.0
        %546 = vmatpush1.msra.mxu0 0.0
        %547 = vmatprep.subr.mxu0 0.0
        %548 = vmatpush1.msra.mxu0 0.0
        %549 = vmatprep.subr.mxu0 0.0
        %550 = vmatpush1.msra.mxu0 0.0
        %551 = vmatprep.subr.mxu0 0.0
        %552 = vmatpush1.msra.mxu0 0.0
        %553 = vmatprep.subr.mxu0 0.0
        %554 = vmatpush1.msra.mxu0 0.0
        %555 = vmatprep.subr.mxu0 0.0
        %556 = vmatpush1.msra.mxu0 0.0
        %557 = vmatprep.subr.mxu0 0.0
        %558 = vmatpush1.msra.mxu0 0.0
        %559 = vmatprep.subr.mxu0 0.0
        %560 = vmatpush1.msra.mxu0 0.0
        %561 = vmatprep.subr.mxu0 0.0
        %562 = vmatpush1.msra.mxu0 0.0
        %563 = vmatprep.subr.mxu0 0.0
        %564 = vmatpush1.msra.mxu0 0.0
        %565 = vmatprep.subr.mxu0 0.0
        %566 = vmatpush1.msra.mxu0 0.0
        %567 = vmatprep.subr.mxu0 0.0
        %568 = vmatpush1.msra.mxu0 0.0
        %569 = vmatprep.mubr.f32.mxu0 0.0
        %570 = vmatmul.mubr.f32.gmra.mrb[0].mxu0 %v500
        %v571 = vpop.f32.mrb[0].mxu0
        %v572 = vadd.f32 0.0, %v571
        %v573 = vpop.f32.mrb[0].mxu0
        %574 = vmatprep.mubr.f32.mxu0 0.0
        %575 = vmatmul.mubr.f32.gmra.mrb[0].mxu0 %v503
        %v576 = vpop.f32.mrb[0].mxu0
        %v577 = vadd.f32 0.0, %v576
        %v578 = vpop.f32.mrb[0].mxu0
        %579 = vdwg.mxu0
        %vm580 = vcmask 785408
        %581 = vst.msk [vmem:[#allocation2] sm:$0xff] %vm580, %v572
        %582 = vst.msk [vmem:[#allocation2 + $0x8] sm:$0xff] %vm580, %v577
        %v583 = vld [vmem:[#allocation12] sm:$0xff]
        %v584 = vld [vmem:[#allocation12 + $0x8] sm:$0xff]
        %v585 = vld [vmem:[#allocation12 + $0x10] sm:$0xff]
        %v586 = vld [vmem:[#allocation12 + $0x18] sm:$0xff]
        %v588 = vsel %vm498, %v493, 0
        %590 = vmatprep.subr.mxu0 0.0
        %591 = vmatpush1.msra.mxu0 %v583
        %592 = vmatprep.subr.mxu0 0.0
        %593 = vmatpush1.msra.mxu0 %v584
        %594 = vmatprep.subr.mxu0 0.0
        %595 = vmatpush1.msra.mxu0 %v585
        %596 = vmatprep.subr.mxu0 0.0
        %597 = vmatpush1.msra.mxu0 %v586
        %598 = vmatprep.subr.mxu0 0.0
        %599 = vmatpush1.msra.mxu0 0.0
        %600 = vmatprep.subr.mxu0 0.0
        %601 = vmatpush1.msra.mxu0 0.0
        %602 = vmatprep.subr.mxu0 0.0
        %603 = vmatpush1.msra.mxu0 0.0
        %604 = vmatprep.subr.mxu0 0.0
        %605 = vmatpush1.msra.mxu0 0.0
        %606 = vmatprep.subr.mxu0 0.0
        %607 = vmatpush1.msra.mxu0 0.0
        %608 = vmatprep.subr.mxu0 0.0
        %609 = vmatpush1.msra.mxu0 0.0
        %610 = vmatprep.subr.mxu0 0.0
        %611 = vmatpush1.msra.mxu0 0.0
        %612 = vmatprep.subr.mxu0 0.0
        %613 = vmatpush1.msra.mxu0 0.0
        %614 = vmatprep.subr.mxu0 0.0
        %615 = vmatpush1.msra.mxu0 0.0
        %616 = vmatprep.subr.mxu0 0.0
        %617 = vmatpush1.msra.mxu0 0.0
        %618 = vmatprep.subr.mxu0 0.0
        %619 = vmatpush1.msra.mxu0 0.0
        %620 = vmatprep.subr.mxu0 0.0
        %621 = vmatpush1.msra.mxu0 0.0
        %622 = vmatprep.subr.mxu0 0.0
        %623 = vmatpush1.msra.mxu0 0.0
        %624 = vmatprep.subr.mxu0 0.0
        %625 = vmatpush1.msra.mxu0 0.0
        %626 = vmatprep.subr.mxu0 0.0
        %627 = vmatpush1.msra.mxu0 0.0
        %628 = vmatprep.subr.mxu0 0.0
        %629 = vmatpush1.msra.mxu0 0.0
        %630 = vmatprep.subr.mxu0 0.0
        %631 = vmatpush1.msra.mxu0 0.0
        %632 = vmatprep.subr.mxu0 0.0
        %633 = vmatpush1.msra.mxu0 0.0
        %634 = vmatprep.subr.mxu0 0.0
        %635 = vmatpush1.msra.mxu0 0.0
        %636 = vmatprep.subr.mxu0 0.0
        %637 = vmatpush1.msra.mxu0 0.0
        %638 = vmatprep.subr.mxu0 0.0
        %639 = vmatpush1.msra.mxu0 0.0
        %640 = vmatprep.subr.mxu0 0.0
        %641 = vmatpush1.msra.mxu0 0.0
        %642 = vmatprep.subr.mxu0 0.0
        %643 = vmatpush1.msra.mxu0 0.0
        %644 = vmatprep.subr.mxu0 0.0
        %645 = vmatpush1.msra.mxu0 0.0
        %646 = vmatprep.subr.mxu0 0.0
        %647 = vmatpush1.msra.mxu0 0.0
        %648 = vmatprep.subr.mxu0 0.0
        %649 = vmatpush1.msra.mxu0 0.0
        %650 = vmatprep.subr.mxu0 0.0
        %651 = vmatpush1.msra.mxu0 0.0
        %652 = vmatprep.subr.mxu0 0.0
        %653 = vmatpush1.msra.mxu0 0.0
        %654 = vmatprep.mubr.f32.mxu0 0.0
        %655 = vmatmul.mubr.f32.gmra.mrb[0].mxu0 %v588
        %v656 = vpop.f32.mrb[0].mxu0
        %v657 = vadd.f32 0.0, %v656
        %v658 = vpop.f32.mrb[0].mxu0
        %659 = vdwg.mxu0
        %660 = vst.msk [vmem:[#allocation3] sm:$0xff] %vm580, %v657
        %661 = vst.msk [vmem:[#allocation4] sm:$0xff] %vm498, 0.0
        %662 = vst.msk [vmem:[#allocation4 + $0x8] sm:$0xff] %vm498, 0.0
        %663 = vst.msk [vmem:[#allocation5] sm:$0xff] %vm498, 0.0
        %v664 = vld [vmem:[#allocation2] sm:$0xff]
        %v665 = vld [vmem:[#allocation2 + $0x8] sm:$0xff]
        %v666 = vld [vmem:[#allocation3] sm:$0xff]
        %668 = vrot.lane.b32.xlu0 %v666, 96
        %v669 = vpop.permute.xlu0 %668
        %vm670 = vcmask 130048
        %v672 = vsel %vm670, %v664, 0
        %v675 = vsel %vm670, %v665, 0
        %v677 = vsel %vm670, %v669, 0
        %679 = vmatprep.subr.mxu0 0.0
        %680 = vmatpush1.xpose.msra.mxu0 %v677
        %681 = vmatprep.subr.mxu0 0.0
        %682 = vmatpush1.xpose.msra.mxu0 0.0
        %683 = vmatprep.subr.mxu0 0.0
        %684 = vmatpush1.xpose.msra.mxu0 0.0
        %685 = vmatprep.subr.mxu0 0.0
        %686 = vmatpush1.xpose.msra.mxu0 0.0
        %687 = vmatprep.subr.mxu0 0.0
        %688 = vmatpush1.xpose.msra.mxu0 0.0
        %689 = vmatprep.subr.mxu0 0.0
        %690 = vmatpush1.xpose.msra.mxu0 0.0
        %691 = vmatprep.subr.mxu0 0.0
        %692 = vmatpush1.xpose.msra.mxu0 0.0
        %693 = vmatprep.subr.mxu0 0.0
        %694 = vmatpush1.xpose.msra.mxu0 0.0
        %695 = vmatprep.subr.mxu0 0.0
        %696 = vmatpush1.xpose.msra.mxu0 0.0
        %697 = vmatprep.subr.mxu0 0.0
        %698 = vmatpush1.xpose.msra.mxu0 0.0
        %699 = vmatprep.subr.mxu0 0.0
        %700 = vmatpush1.xpose.msra.mxu0 0.0
        %701 = vmatprep.subr.mxu0 0.0
        %702 = vmatpush1.xpose.msra.mxu0 0.0
        %703 = vmatprep.subr.mxu0 0.0
        %704 = vmatpush1.xpose.msra.mxu0 0.0
        %705 = vmatprep.subr.mxu0 0.0
        %706 = vmatpush1.xpose.msra.mxu0 0.0
        %707 = vmatprep.subr.mxu0 0.0
        %708 = vmatpush1.xpose.msra.mxu0 0.0
        %709 = vmatprep.subr.mxu0 0.0
        %710 = vmatpush1.xpose.msra.mxu0 0.0
        %711 = vmatprep.subr.mxu0 0.0
        %712 = vmatpush1.xpose.msra.mxu0 0.0
        %713 = vmatprep.subr.mxu0 0.0
        %714 = vmatpush1.xpose.msra.mxu0 0.0
        %715 = vmatprep.subr.mxu0 0.0
        %716 = vmatpush1.xpose.msra.mxu0 0.0
        %717 = vmatprep.subr.mxu0 0.0
        %718 = vmatpush1.xpose.msra.mxu0 0.0
        %719 = vmatprep.subr.mxu0 0.0
        %720 = vmatpush1.xpose.msra.mxu0 0.0
        %721 = vmatprep.subr.mxu0 0.0
        %722 = vmatpush1.xpose.msra.mxu0 0.0
        %723 = vmatprep.subr.mxu0 0.0
        %724 = vmatpush1.xpose.msra.mxu0 0.0
        %725 = vmatprep.subr.mxu0 0.0
        %726 = vmatpush1.xpose.msra.mxu0 0.0
        %727 = vmatprep.subr.mxu0 0.0
        %728 = vmatpush1.xpose.msra.mxu0 0.0
        %729 = vmatprep.subr.mxu0 0.0
        %730 = vmatpush1.xpose.msra.mxu0 0.0
        %731 = vmatprep.subr.mxu0 0.0
        %732 = vmatpush1.xpose.msra.mxu0 0.0
        %733 = vmatprep.subr.mxu0 0.0
        %734 = vmatpush1.xpose.msra.mxu0 0.0
        %735 = vmatprep.subr.mxu0 0.0
        %736 = vmatpush1.xpose.msra.mxu0 0.0
        %737 = vmatprep.subr.mxu0 0.0
        %738 = vmatpush1.xpose.msra.mxu0 0.0
        %739 = vmatprep.subr.mxu0 0.0
        %740 = vmatpush1.xpose.msra.mxu0 0.0
        %741 = vmatprep.subr.mxu0 0.0
        %742 = vmatpush1.xpose.msra.mxu0 0.0
        %743 = vmatprep.mubr.f32.mxu0 0.0
        %744 = vmatmul.mubr.f32.gmra.mrb[0].mxu0 %v672
        %v745 = vpop.f32.mrb[0].mxu0
        %v746 = vadd.f32 0.0, %v745
        %v747 = vpop.f32.mrb[0].mxu0
        %748 = vmatprep.mubr.f32.mxu0 0.0
        %749 = vmatmul.mubr.f32.gmra.mrb[0].mxu0 %v675
        %v750 = vpop.f32.mrb[0].mxu0
        %v751 = vadd.f32 0.0, %v750
        %v752 = vpop.f32.mrb[0].mxu0
        %753 = vdwg.mxu0
        %vm754 = vcmask 64512
        %v755 = vsel %vm754, %v746, -inf
        %756 = vmax.xlane.f32.xlu0 %v755
        %v757 = vpop.xlane.xlu0 %756
        %v758 = vsel %vm754, %v751, -inf
        %759 = vmax.xlane.f32.xlu0 %v758
        %v760 = vpop.xlane.xlu0 %759
        %v761 = vsub.f32 %v746, %v757
        %v762 = vsub.f32 %v751, %v760
        %v763 = vmul.f32 %v761, 1.442695
        %v764 = vpow.pop %v763
        %v765 = vmul.f32 %v762, 1.442695
        %v766 = vpow.pop %v765
        %v767 = vsel %vm754, %v764, 0.0
        %768 = vadd.xlane.f32.xlu0 %v767
        %v769 = vpop.xlane.xlu0 %768
        %v770 = vsel %vm754, %v766, 0.0
        %771 = vadd.xlane.f32.xlu0 %v770
        %v772 = vpop.xlane.xlu0 %771
        %v773 = vrcp.pop %v769
        %v774 = vrcp.pop %v772
        %v775 = vmul.f32 %v764, %v773
        %v776 = vmul.f32 %v766, %v774
        %777 = vrot.lane.b32.xlu0 %v666, 64
        %v778 = vpop.permute.xlu0 %777
        %v781 = vsel %vm754, %v775, 0
        %v784 = vsel %vm754, %v776, 0
        %786 = vmatprep.subr.mxu0 0.0
        %787 = vmatpush1.msra.mxu0 %v778
        %788 = vmatprep.subr.mxu0 0.0
        %789 = vmatpush1.msra.mxu0 0.0
        %790 = vmatprep.subr.mxu0 0.0
        %791 = vmatpush1.msra.mxu0 0.0
        %792 = vmatprep.subr.mxu0 0.0
        %793 = vmatpush1.msra.mxu0 0.0
        %794 = vmatprep.subr.mxu0 0.0
        %795 = vmatpush1.msra.mxu0 0.0
        %796 = vmatprep.subr.mxu0 0.0
        %797 = vmatpush1.msra.mxu0 0.0
        %798 = vmatprep.subr.mxu0 0.0
        %799 = vmatpush1.msra.mxu0 0.0
        %800 = vmatprep.subr.mxu0 0.0
        %801 = vmatpush1.msra.mxu0 0.0
        %802 = vmatprep.subr.mxu0 0.0
        %803 = vmatpush1.msra.mxu0 0.0
        %804 = vmatprep.subr.mxu0 0.0
        %805 = vmatpush1.msra.mxu0 0.0
        %806 = vmatprep.subr.mxu0 0.0
        %807 = vmatpush1.msra.mxu0 0.0
        %808 = vmatprep.subr.mxu0 0.0
        %809 = vmatpush1.msra.mxu0 0.0
        %810 = vmatprep.subr.mxu0 0.0
        %811 = vmatpush1.msra.mxu0 0.0
        %812 = vmatprep.subr.mxu0 0.0
        %813 = vmatpush1.msra.mxu0 0.0
        %814 = vmatprep.subr.mxu0 0.0
        %815 = vmatpush1.msra.mxu0 0.0
        %816 = vmatprep.subr.mxu0 0.0
        %817 = vmatpush1.msra.mxu0 0.0
        %818 = vmatprep.subr.mxu0 0.0
        %819 = vmatpush1.msra.mxu0 0.0
        %820 = vmatprep.subr.mxu0 0.0
        %821 = vmatpush1.msra.mxu0 0.0
        %822 = vmatprep.subr.mxu0 0.0
        %823 = vmatpush1.msra.mxu0 0.0
        %824 = vmatprep.subr.mxu0 0.0
        %825 = vmatpush1.msra.mxu0 0.0
        %826 = vmatprep.subr.mxu0 0.0
        %827 = vmatpush1.msra.mxu0 0.0
        %828 = vmatprep.subr.mxu0 0.0
        %829 = vmatpush1.msra.mxu0 0.0
        %830 = vmatprep.subr.mxu0 0.0
        %831 = vmatpush1.msra.mxu0 0.0
        %832 = vmatprep.subr.mxu0 0.0
        %833 = vmatpush1.msra.mxu0 0.0
        %834 = vmatprep.subr.mxu0 0.0
        %835 = vmatpush1.msra.mxu0 0.0
        %836 = vmatprep.subr.mxu0 0.0
        %837 = vmatpush1.msra.mxu0 0.0
        %838 = vmatprep.subr.mxu0 0.0
        %839 = vmatpush1.msra.mxu0 0.0
        %840 = vmatprep.subr.mxu0 0.0
        %841 = vmatpush1.msra.mxu0 0.0
        %842 = vmatprep.subr.mxu0 0.0
        %843 = vmatpush1.msra.mxu0 0.0
        %844 = vmatprep.subr.mxu0 0.0
        %845 = vmatpush1.msra.mxu0 0.0
        %846 = vmatprep.subr.mxu0 0.0
        %847 = vmatpush1.msra.mxu0 0.0
        %848 = vmatprep.subr.mxu0 0.0
        %849 = vmatpush1.msra.mxu0 0.0
        %850 = vmatprep.mubr.f32.mxu0 0.0
        %851 = vmatmul.mubr.f32.gmra.mrb[0].mxu0 %v781
        %v852 = vpop.f32.mrb[0].mxu0
        %v853 = vadd.f32 0.0, %v852
        %v854 = vpop.f32.mrb[0].mxu0
        %855 = vmatprep.mubr.f32.mxu0 0.0
        %856 = vmatmul.mubr.f32.gmra.mrb[0].mxu0 %v784
        %v857 = vpop.f32.mrb[0].mxu0
        %v858 = vadd.f32 0.0, %v857
        %v859 = vpop.f32.mrb[0].mxu0
        %860 = vdwg.mxu0
        %v861 = vld [vmem:[#allocation4] sm:$0xff]
        %v862 = vld [vmem:[#allocation4 + $0x8] sm:$0xff]
        %v863 = vld [vmem:[#allocation14] sm:$0xff]
        %v864 = vld [vmem:[#allocation14 + $0x8] sm:$0xff]
        %v866 = vsel %vm670, %v853, 0
        %v869 = vsel %vm670, %v858, 0
        %871 = vmatprep.subr.mxu0 0.0
        %872 = vmatpush1.msra.mxu0 %v863
        %873 = vmatprep.subr.mxu0 0.0
        %874 = vmatpush1.msra.mxu0 %v864
        %875 = vmatprep.subr.mxu0 0.0
        %876 = vmatpush1.msra.mxu0 0.0
        %877 = vmatprep.subr.mxu0 0.0
        %878 = vmatpush1.msra.mxu0 0.0
        %879 = vmatprep.subr.mxu0 0.0
        %880 = vmatpush1.msra.mxu0 0.0
        %881 = vmatprep.subr.mxu0 0.0
        %882 = vmatpush1.msra.mxu0 0.0
        %883 = vmatprep.subr.mxu0 0.0
        %884 = vmatpush1.msra.mxu0 0.0
        %885 = vmatprep.subr.mxu0 0.0
        %886 = vmatpush1.msra.mxu0 0.0
        %887 = vmatprep.subr.mxu0 0.0
        %888 = vmatpush1.msra.mxu0 0.0
        %889 = vmatprep.subr.mxu0 0.0
        %890 = vmatpush1.msra.mxu0 0.0
        %891 = vmatprep.subr.mxu0 0.0
        %892 = vmatpush1.msra.mxu0 0.0
        %893 = vmatprep.subr.mxu0 0.0
        %894 = vmatpush1.msra.mxu0 0.0
        %895 = vmatprep.subr.mxu0 0.0
        %896 = vmatpush1.msra.mxu0 0.0
        %897 = vmatprep.subr.mxu0 0.0
        %898 = vmatpush1.msra.mxu0 0.0
        %899 = vmatprep.subr.mxu0 0.0
        %900 = vmatpush1.msra.mxu0 0.0
        %901 = vmatprep.subr.mxu0 0.0
        %902 = vmatpush1.msra.mxu0 0.0
        %903 = vmatprep.subr.mxu0 0.0
        %904 = vmatpush1.msra.mxu0 0.0
        %905 = vmatprep.subr.mxu0 0.0
        %906 = vmatpush1.msra.mxu0 0.0
        %907 = vmatprep.subr.mxu0 0.0
        %908 = vmatpush1.msra.mxu0 0.0
        %909 = vmatprep.subr.mxu0 0.0
        %910 = vmatpush1.msra.mxu0 0.0
        %911 = vmatprep.subr.mxu0 0.0
        %912 = vmatpush1.msra.mxu0 0.0
        %913 = vmatprep.subr.mxu0 0.0
        %914 = vmatpush1.msra.mxu0 0.0
        %915 = vmatprep.subr.mxu0 0.0
        %916 = vmatpush1.msra.mxu0 0.0
        %917 = vmatprep.subr.mxu0 0.0
        %918 = vmatpush1.msra.mxu0 0.0
        %919 = vmatprep.subr.mxu0 0.0
        %920 = vmatpush1.msra.mxu0 0.0
        %921 = vmatprep.subr.mxu0 0.0
        %922 = vmatpush1.msra.mxu0 0.0
        %923 = vmatprep.subr.mxu0 0.0
        %924 = vmatpush1.msra.mxu0 0.0
        %925 = vmatprep.subr.mxu0 0.0
        %926 = vmatpush1.msra.mxu0 0.0
        %927 = vmatprep.subr.mxu0 0.0
        %928 = vmatpush1.msra.mxu0 0.0
        %929 = vmatprep.subr.mxu0 0.0
        %930 = vmatpush1.msra.mxu0 0.0
        %931 = vmatprep.subr.mxu0 0.0
        %932 = vmatpush1.msra.mxu0 0.0
        %933 = vmatprep.subr.mxu0 0.0
        %934 = vmatpush1.msra.mxu0 0.0
        %935 = vmatprep.mubr.f32.mxu0 0.0
        %936 = vmatmul.mubr.f32.gmra.mrb[0].mxu0 %v866
        %v937 = vpop.f32.mrb[0].mxu0
        %v938 = vadd.f32 0.0, %v937
        %v939 = vpop.f32.mrb[0].mxu0
        %940 = vmatprep.mubr.f32.mxu0 0.0
        %941 = vmatmul.mubr.f32.gmra.mrb[0].mxu0 %v869
        %v942 = vpop.f32.mrb[0].mxu0
        %v943 = vadd.f32 0.0, %v942
        %v944 = vpop.f32.mrb[0].mxu0
        %945 = vdwg.mxu0
        %v946 = vadd.f32 %v861, %v938
        %v947 = vadd.f32 %v862, %v943
        %948 = vst.msk [vmem:[#allocation4] sm:$0xff] %vm498, %v946
        %949 = vst.msk [vmem:[#allocation4 + $0x8] sm:$0xff] %vm498, %v947
        %950 = vrot.lane.b32.xlu0 %v664, 96
        %v951 = vpop.permute.xlu0 %950
        %952 = vrot.lane.b32.xlu0 %v665, 96
        %v953 = vpop.permute.xlu0 %952
        %v954 = vsel %vm670, %v666, 0
        %v956 = vsel %vm670, %v951, 0
        %v958 = vsel %vm670, %v953, 0
        %960 = vmatprep.subr.mxu0 0.0
        %961 = vmatpush1.xpose.msra.mxu0 %v956
        %962 = vmatprep.subr.mxu0 0.0
        %963 = vmatpush1.xpose.msra.mxu0 %v958
        %964 = vmatprep.subr.mxu0 0.0
        %965 = vmatpush1.xpose.msra.mxu0 0.0
        %966 = vmatprep.subr.mxu0 0.0
        %967 = vmatpush1.xpose.msra.mxu0 0.0
        %968 = vmatprep.subr.mxu0 0.0
        %969 = vmatpush1.xpose.msra.mxu0 0.0
        %970 = vmatprep.subr.mxu0 0.0
        %971 = vmatpush1.xpose.msra.mxu0 0.0
        %972 = vmatprep.subr.mxu0 0.0
        %973 = vmatpush1.xpose.msra.mxu0 0.0
        %974 = vmatprep.subr.mxu0 0.0
        %975 = vmatpush1.xpose.msra.mxu0 0.0
        %976 = vmatprep.subr.mxu0 0.0
        %977 = vmatpush1.xpose.msra.mxu0 0.0
        %978 = vmatprep.subr.mxu0 0.0
        %979 = vmatpush1.xpose.msra.mxu0 0.0
        %980 = vmatprep.subr.mxu0 0.0
        %981 = vmatpush1.xpose.msra.mxu0 0.0
        %982 = vmatprep.subr.mxu0 0.0
        %983 = vmatpush1.xpose.msra.mxu0 0.0
        %984 = vmatprep.subr.mxu0 0.0
        %985 = vmatpush1.xpose.msra.mxu0 0.0
        %986 = vmatprep.subr.mxu0 0.0
        %987 = vmatpush1.xpose.msra.mxu0 0.0
        %988 = vmatprep.subr.mxu0 0.0
        %989 = vmatpush1.xpose.msra.mxu0 0.0
        %990 = vmatprep.subr.mxu0 0.0
        %991 = vmatpush1.xpose.msra.mxu0 0.0
        %992 = vmatprep.subr.mxu0 0.0
        %993 = vmatpush1.xpose.msra.mxu0 0.0
        %994 = vmatprep.subr.mxu0 0.0
        %995 = vmatpush1.xpose.msra.mxu0 0.0
        %996 = vmatprep.subr.mxu0 0.0
        %997 = vmatpush1.xpose.msra.mxu0 0.0
        %998 = vmatprep.subr.mxu0 0.0
        %999 = vmatpush1.xpose.msra.mxu0 0.0
        %1000 = vmatprep.subr.mxu0 0.0
        %1001 = vmatpush1.xpose.msra.mxu0 0.0
        %1002 = vmatprep.subr.mxu0 0.0
        %1003 = vmatpush1.xpose.msra.mxu0 0.0
        %1004 = vmatprep.subr.mxu0 0.0
        %1005 = vmatpush1.xpose.msra.mxu0 0.0
        %1006 = vmatprep.subr.mxu0 0.0
        %1007 = vmatpush1.xpose.msra.mxu0 0.0
        %1008 = vmatprep.subr.mxu0 0.0
        %1009 = vmatpush1.xpose.msra.mxu0 0.0
        %1010 = vmatprep.subr.mxu0 0.0
        %1011 = vmatpush1.xpose.msra.mxu0 0.0
        %1012 = vmatprep.subr.mxu0 0.0
        %1013 = vmatpush1.xpose.msra.mxu0 0.0
        %1014 = vmatprep.subr.mxu0 0.0
        %1015 = vmatpush1.xpose.msra.mxu0 0.0
        %1016 = vmatprep.subr.mxu0 0.0
        %1017 = vmatpush1.xpose.msra.mxu0 0.0
        %1018 = vmatprep.subr.mxu0 0.0
        %1019 = vmatpush1.xpose.msra.mxu0 0.0
        %1020 = vmatprep.subr.mxu0 0.0
        %1021 = vmatpush1.xpose.msra.mxu0 0.0
        %1022 = vmatprep.subr.mxu0 0.0
        %1023 = vmatpush1.xpose.msra.mxu0 0.0
        %1024 = vmatprep.mubr.f32.mxu0 0.0
        %1025 = vmatmul.mubr.f32.gmra.mrb[0].mxu0 %v954
        %v1026 = vpop.f32.mrb[0].mxu0
        %v1027 = vadd.f32 0.0, %v1026
        %v1028 = vpop.f32.mrb[0].mxu0
        %1029 = vdwg.mxu0
        %v1030 = vsel %vm670, %v1027, -inf
        %1031 = vmax.xlane.f32.xlu0 %v1030
        %v1032 = vpop.xlane.xlu0 %1031
        %v1033 = vsub.f32 %v1027, %v1032
        %v1034 = vmul.f32 %v1033, 1.442695
        %v1035 = vpow.pop %v1034
        %v1036 = vsel %vm670, %v1035, 0.0
        %1037 = vadd.xlane.f32.xlu0 %v1036
        %v1038 = vpop.xlane.xlu0 %1037
        %v1039 = vrcp.pop %v1038
        %v1040 = vmul.f32 %v1035, %v1039
        %1041 = vst.msk [vmem:[%s490] sm:$0xff] %vm670, %v1040
        %1042 = vrot.lane.b32.xlu0 %v664, 64
        %v1043 = vpop.permute.xlu0 %1042
        %1044 = vrot.lane.b32.xlu0 %v665, 64
        %v1045 = vpop.permute.xlu0 %1044
        %v1049 = vsel %vm670, %v1040, 0
        %1051 = vmatprep.subr.mxu0 0.0
        %1052 = vmatpush1.msra.mxu0 %v1043
        %1053 = vmatprep.subr.mxu0 0.0
        %1054 = vmatpush1.msra.mxu0 %v1045
        %1055 = vmatprep.subr.mxu0 0.0
        %1056 = vmatpush1.msra.mxu0 0.0
        %1057 = vmatprep.subr.mxu0 0.0
        %1058 = vmatpush1.msra.mxu0 0.0
        %1059 = vmatprep.subr.mxu0 0.0
        %1060 = vmatpush1.msra.mxu0 0.0
        %1061 = vmatprep.subr.mxu0 0.0
        %1062 = vmatpush1.msra.mxu0 0.0
        %1063 = vmatprep.subr.mxu0 0.0
        %1064 = vmatpush1.msra.mxu0 0.0
        %1065 = vmatprep.subr.mxu0 0.0
        %1066 = vmatpush1.msra.mxu0 0.0
        %1067 = vmatprep.subr.mxu0 0.0
        %1068 = vmatpush1.msra.mxu0 0.0
        %1069 = vmatprep.subr.mxu0 0.0
        %1070 = vmatpush1.msra.mxu0 0.0
        %1071 = vmatprep.subr.mxu0 0.0
        %1072 = vmatpush1.msra.mxu0 0.0
        %1073 = vmatprep.subr.mxu0 0.0
        %1074 = vmatpush1.msra.mxu0 0.0
        %1075 = vmatprep.subr.mxu0 0.0
        %1076 = vmatpush1.msra.mxu0 0.0
        %1077 = vmatprep.subr.mxu0 0.0
        %1078 = vmatpush1.msra.mxu0 0.0
        %1079 = vmatprep.subr.mxu0 0.0
        %1080 = vmatpush1.msra.mxu0 0.0
        %1081 = vmatprep.subr.mxu0 0.0
        %1082 = vmatpush1.msra.mxu0 0.0
        %1083 = vmatprep.subr.mxu0 0.0
        %1084 = vmatpush1.msra.mxu0 0.0
        %1085 = vmatprep.subr.mxu0 0.0
        %1086 = vmatpush1.msra.mxu0 0.0
        %1087 = vmatprep.subr.mxu0 0.0
        %1088 = vmatpush1.msra.mxu0 0.0
        %1089 = vmatprep.subr.mxu0 0.0
        %1090 = vmatpush1.msra.mxu0 0.0
        %1091 = vmatprep.subr.mxu0 0.0
        %1092 = vmatpush1.msra.mxu0 0.0
        %1093 = vmatprep.subr.mxu0 0.0
        %1094 = vmatpush1.msra.mxu0 0.0
        %1095 = vmatprep.subr.mxu0 0.0
        %1096 = vmatpush1.msra.mxu0 0.0
        %1097 = vmatprep.subr.mxu0 0.0
        %1098 = vmatpush1.msra.mxu0 0.0
        %1099 = vmatprep.subr.mxu0 0.0
        %1100 = vmatpush1.msra.mxu0 0.0
        %1101 = vmatprep.subr.mxu0 0.0
        %1102 = vmatpush1.msra.mxu0 0.0
        %1103 = vmatprep.subr.mxu0 0.0
        %1104 = vmatpush1.msra.mxu0 0.0
        %1105 = vmatprep.subr.mxu0 0.0
        %1106 = vmatpush1.msra.mxu0 0.0
        %1107 = vmatprep.subr.mxu0 0.0
        %1108 = vmatpush1.msra.mxu0 0.0
        %1109 = vmatprep.subr.mxu0 0.0
        %1110 = vmatpush1.msra.mxu0 0.0
        %1111 = vmatprep.subr.mxu0 0.0
        %1112 = vmatpush1.msra.mxu0 0.0
        %1113 = vmatprep.subr.mxu0 0.0
        %1114 = vmatpush1.msra.mxu0 0.0
        %1115 = vmatprep.mubr.f32.mxu0 0.0
        %1116 = vmatmul.mubr.f32.gmra.mrb[0].mxu0 %v1049
        %v1117 = vpop.f32.mrb[0].mxu0
        %v1118 = vadd.f32 0.0, %v1117
        %v1119 = vpop.f32.mrb[0].mxu0
        %1120 = vdwg.mxu0
        %v1121 = vld [vmem:[#allocation5] sm:$0xff]
        %v1122 = vld [vmem:[#allocation15] sm:$0xff]
        %v1123 = vld [vmem:[#allocation15 + $0x8] sm:$0xff]
        %v1125 = vsel %vm670, %v1118, 0
        %1127 = vmatprep.subr.mxu0 0.0
        %1128 = vmatpush1.msra.mxu0 %v1122
        %1129 = vmatprep.subr.mxu0 0.0
        %1130 = vmatpush1.msra.mxu0 %v1123
        %1131 = vmatprep.subr.mxu0 0.0
        %1132 = vmatpush1.msra.mxu0 0.0
        %1133 = vmatprep.subr.mxu0 0.0
        %1134 = vmatpush1.msra.mxu0 0.0
        %1135 = vmatprep.subr.mxu0 0.0
        %1136 = vmatpush1.msra.mxu0 0.0
        %1137 = vmatprep.subr.mxu0 0.0
        %1138 = vmatpush1.msra.mxu0 0.0
        %1139 = vmatprep.subr.mxu0 0.0
        %1140 = vmatpush1.msra.mxu0 0.0
        %1141 = vmatprep.subr.mxu0 0.0
        %1142 = vmatpush1.msra.mxu0 0.0
        %1143 = vmatprep.subr.mxu0 0.0
        %1144 = vmatpush1.msra.mxu0 0.0
        %1145 = vmatprep.subr.mxu0 0.0
        %1146 = vmatpush1.msra.mxu0 0.0
        %1147 = vmatprep.subr.mxu0 0.0
        %1148 = vmatpush1.msra.mxu0 0.0
        %1149 = vmatprep.subr.mxu0 0.0
        %1150 = vmatpush1.msra.mxu0 0.0
        %1151 = vmatprep.subr.mxu0 0.0
        %1152 = vmatpush1.msra.mxu0 0.0
        %1153 = vmatprep.subr.mxu0 0.0
        %1154 = vmatpush1.msra.mxu0 0.0
        %1155 = vmatprep.subr.mxu0 0.0
        %1156 = vmatpush1.msra.mxu0 0.0
        %1157 = vmatprep.subr.mxu0 0.0
        %1158 = vmatpush1.msra.mxu0 0.0
        %1159 = vmatprep.subr.mxu0 0.0
        %1160 = vmatpush1.msra.mxu0 0.0
        %1161 = vmatprep.subr.mxu0 0.0
        %1162 = vmatpush1.msra.mxu0 0.0
        %1163 = vmatprep.subr.mxu0 0.0
        %1164 = vmatpush1.msra.mxu0 0.0
        %1165 = vmatprep.subr.mxu0 0.0
        %1166 = vmatpush1.msra.mxu0 0.0
        %1167 = vmatprep.subr.mxu0 0.0
        %1168 = vmatpush1.msra.mxu0 0.0
        %1169 = vmatprep.subr.mxu0 0.0
        %1170 = vmatpush1.msra.mxu0 0.0
        %1171 = vmatprep.subr.mxu0 0.0
        %1172 = vmatpush1.msra.mxu0 0.0
        %1173 = vmatprep.subr.mxu0 0.0
        %1174 = vmatpush1.msra.mxu0 0.0
        %1175 = vmatprep.subr.mxu0 0.0
        %1176 = vmatpush1.msra.mxu0 0.0
        %1177 = vmatprep.subr.mxu0 0.0
        %1178 = vmatpush1.msra.mxu0 0.0
        %1179 = vmatprep.subr.mxu0 0.0
        %1180 = vmatpush1.msra.mxu0 0.0
        %1181 = vmatprep.subr.mxu0 0.0
        %1182 = vmatpush1.msra.mxu0 0.0
        %1183 = vmatprep.subr.mxu0 0.0
        %1184 = vmatpush1.msra.mxu0 0.0
        %1185 = vmatprep.subr.mxu0 0.0
        %1186 = vmatpush1.msra.mxu0 0.0
        %1187 = vmatprep.subr.mxu0 0.0
        %1188 = vmatpush1.msra.mxu0 0.0
        %1189 = vmatprep.subr.mxu0 0.0
        %1190 = vmatpush1.msra.mxu0 0.0
        %1191 = vmatprep.mubr.f32.mxu0 0.0
        %1192 = vmatmul.mubr.f32.gmra.mrb[0].mxu0 %v1125
        %v1193 = vpop.f32.mrb[0].mxu0
        %v1194 = vadd.f32 0.0, %v1193
        %v1195 = vpop.f32.mrb[0].mxu0
        %1196 = vdwg.mxu0
        %v1197 = vadd.f32 %v1121, %v1194
        %1198 = vst.msk [vmem:[#allocation5] sm:$0xff] %vm498, %v1197
        %v1199 = vld [vmem:[#allocation2] sm:$0xff]
        %v1200 = vld [vmem:[#allocation2 + $0x8] sm:$0xff]
        %v1201 = vld [vmem:[#allocation3] sm:$0xff]
        %1204 = vrot.lane.b32.xlu0 %v1199, 112
        %v1205 = vpop.permute.xlu0 %1204
        %1206 = vrot.lane.b32.xlu0 %v1200, 112
        %v1207 = vpop.permute.xlu0 %1206
        %1209 = vrot.lane.b32.xlu0 %v1201, 80
        %v1210 = vpop.permute.xlu0 %1209
        %v1211 = vsel %vm670, %v1205, 0
        %v1213 = vsel %vm670, %v1207, 0
        %v1215 = vsel %vm670, %v1210, 0
        %1217 = vmatprep.subr.mxu0 0.0
        %1218 = vmatpush1.xpose.msra.mxu0 %v1215
        %1219 = vmatprep.subr.mxu0 0.0
        %1220 = vmatpush1.xpose.msra.mxu0 0.0
        %1221 = vmatprep.subr.mxu0 0.0
        %1222 = vmatpush1.xpose.msra.mxu0 0.0
        %1223 = vmatprep.subr.mxu0 0.0
        %1224 = vmatpush1.xpose.msra.mxu0 0.0
        %1225 = vmatprep.subr.mxu0 0.0
        %1226 = vmatpush1.xpose.msra.mxu0 0.0
        %1227 = vmatprep.subr.mxu0 0.0
        %1228 = vmatpush1.xpose.msra.mxu0 0.0
        %1229 = vmatprep.subr.mxu0 0.0
        %1230 = vmatpush1.xpose.msra.mxu0 0.0
        %1231 = vmatprep.subr.mxu0 0.0
        %1232 = vmatpush1.xpose.msra.mxu0 0.0
        %1233 = vmatprep.subr.mxu0 0.0
        %1234 = vmatpush1.xpose.msra.mxu0 0.0
        %1235 = vmatprep.subr.mxu0 0.0
        %1236 = vmatpush1.xpose.msra.mxu0 0.0
        %1237 = vmatprep.subr.mxu0 0.0
        %1238 = vmatpush1.xpose.msra.mxu0 0.0
        %1239 = vmatprep.subr.mxu0 0.0
        %1240 = vmatpush1.xpose.msra.mxu0 0.0
        %1241 = vmatprep.subr.mxu0 0.0
        %1242 = vmatpush1.xpose.msra.mxu0 0.0
        %1243 = vmatprep.subr.mxu0 0.0
        %1244 = vmatpush1.xpose.msra.mxu0 0.0
        %1245 = vmatprep.subr.mxu0 0.0
        %1246 = vmatpush1.xpose.msra.mxu0 0.0
        %1247 = vmatprep.subr.mxu0 0.0
        %1248 = vmatpush1.xpose.msra.mxu0 0.0
        %1249 = vmatprep.subr.mxu0 0.0
        %1250 = vmatpush1.xpose.msra.mxu0 0.0
        %1251 = vmatprep.subr.mxu0 0.0
        %1252 = vmatpush1.xpose.msra.mxu0 0.0
        %1253 = vmatprep.subr.mxu0 0.0
        %1254 = vmatpush1.xpose.msra.mxu0 0.0
        %1255 = vmatprep.subr.mxu0 0.0
        %1256 = vmatpush1.xpose.msra.mxu0 0.0
        %1257 = vmatprep.subr.mxu0 0.0
        %1258 = vmatpush1.xpose.msra.mxu0 0.0
        %1259 = vmatprep.subr.mxu0 0.0
        %1260 = vmatpush1.xpose.msra.mxu0 0.0
        %1261 = vmatprep.subr.mxu0 0.0
        %1262 = vmatpush1.xpose.msra.mxu0 0.0
        %1263 = vmatprep.subr.mxu0 0.0
        %1264 = vmatpush1.xpose.msra.mxu0 0.0
        %1265 = vmatprep.subr.mxu0 0.0
        %1266 = vmatpush1.xpose.msra.mxu0 0.0
        %1267 = vmatprep.subr.mxu0 0.0
        %1268 = vmatpush1.xpose.msra.mxu0 0.0
        %1269 = vmatprep.subr.mxu0 0.0
        %1270 = vmatpush1.xpose.msra.mxu0 0.0
        %1271 = vmatprep.subr.mxu0 0.0
        %1272 = vmatpush1.xpose.msra.mxu0 0.0
        %1273 = vmatprep.subr.mxu0 0.0
        %1274 = vmatpush1.xpose.msra.mxu0 0.0
        %1275 = vmatprep.subr.mxu0 0.0
        %1276 = vmatpush1.xpose.msra.mxu0 0.0
        %1277 = vmatprep.subr.mxu0 0.0
        %1278 = vmatpush1.xpose.msra.mxu0 0.0
        %1279 = vmatprep.subr.mxu0 0.0
        %1280 = vmatpush1.xpose.msra.mxu0 0.0
        %1281 = vmatprep.mubr.f32.mxu0 0.0
        %1282 = vmatmul.mubr.f32.gmra.mrb[0].mxu0 %v1211
        %v1283 = vpop.f32.mrb[0].mxu0
        %v1284 = vadd.f32 0.0, %v1283
        %v1285 = vpop.f32.mrb[0].mxu0
        %1286 = vmatprep.mubr.f32.mxu0 0.0
        %1287 = vmatmul.mubr.f32.gmra.mrb[0].mxu0 %v1213
        %v1288 = vpop.f32.mrb[0].mxu0
        %v1289 = vadd.f32 0.0, %v1288
        %v1290 = vpop.f32.mrb[0].mxu0
        %1291 = vdwg.mxu0
        %v1292 = vsel %vm754, %v1284, -inf
        %1293 = vmax.xlane.f32.xlu0 %v1292
        %v1294 = vpop.xlane.xlu0 %1293
        %v1295 = vsel %vm754, %v1289, -inf
        %1296 = vmax.xlane.f32.xlu0 %v1295
        %v1297 = vpop.xlane.xlu0 %1296
        %v1298 = vsub.f32 %v1284, %v1294
        %v1299 = vsub.f32 %v1289, %v1297
        %v1300 = vmul.f32 %v1298, 1.442695
        %v1301 = vpow.pop %v1300
        %v1302 = vmul.f32 %v1299, 1.442695
        %v1303 = vpow.pop %v1302
        %v1304 = vsel %vm754, %v1301, 0.0
        %1305 = vadd.xlane.f32.xlu0 %v1304
        %v1306 = vpop.xlane.xlu0 %1305
        %v1307 = vsel %vm754, %v1303, 0.0
        %1308 = vadd.xlane.f32.xlu0 %v1307
        %v1309 = vpop.xlane.xlu0 %1308
        %v1310 = vrcp.pop %v1306
        %v1311 = vrcp.pop %v1309
        %v1312 = vmul.f32 %v1301, %v1310
        %v1313 = vmul.f32 %v1303, %v1311
        %1314 = vrot.lane.b32.xlu0 %v1201, 48
        %v1315 = vpop.permute.xlu0 %1314
        %v1318 = vsel %vm754, %v1312, 0
        %v1321 = vsel %vm754, %v1313, 0
        %1323 = vmatprep.subr.mxu0 0.0
        %1324 = vmatpush1.msra.mxu0 %v1315
        %1325 = vmatprep.subr.mxu0 0.0
        %1326 = vmatpush1.msra.mxu0 0.0
        %1327 = vmatprep.subr.mxu0 0.0
        %1328 = vmatpush1.msra.mxu0 0.0
        %1329 = vmatprep.subr.mxu0 0.0
        %1330 = vmatpush1.msra.mxu0 0.0
        %1331 = vmatprep.subr.mxu0 0.0
        %1332 = vmatpush1.msra.mxu0 0.0
        %1333 = vmatprep.subr.mxu0 0.0
        %1334 = vmatpush1.msra.mxu0 0.0
        %1335 = vmatprep.subr.mxu0 0.0
        %1336 = vmatpush1.msra.mxu0 0.0
        %1337 = vmatprep.subr.mxu0 0.0
        %1338 = vmatpush1.msra.mxu0 0.0
        %1339 = vmatprep.subr.mxu0 0.0
        %1340 = vmatpush1.msra.mxu0 0.0
        %1341 = vmatprep.subr.mxu0 0.0
        %1342 = vmatpush1.msra.mxu0 0.0
        %1343 = vmatprep.subr.mxu0 0.0
        %1344 = vmatpush1.msra.mxu0 0.0
        %1345 = vmatprep.subr.mxu0 0.0
        %1346 = vmatpush1.msra.mxu0 0.0
        %1347 = vmatprep.subr.mxu0 0.0
        %1348 = vmatpush1.msra.mxu0 0.0
        %1349 = vmatprep.subr.mxu0 0.0
        %1350 = vmatpush1.msra.mxu0 0.0
        %1351 = vmatprep.subr.mxu0 0.0
        %1352 = vmatpush1.msra.mxu0 0.0
        %1353 = vmatprep.subr.mxu0 0.0
        %1354 = vmatpush1.msra.mxu0 0.0
        %1355 = vmatprep.subr.mxu0 0.0
        %1356 = vmatpush1.msra.mxu0 0.0
        %1357 = vmatprep.subr.mxu0 0.0
        %1358 = vmatpush1.msra.mxu0 0.0
        %1359 = vmatprep.subr.mxu0 0.0
        %1360 = vmatpush1.msra.mxu0 0.0
        %1361 = vmatprep.subr.mxu0 0.0
        %1362 = vmatpush1.msra.mxu0 0.0
        %1363 = vmatprep.subr.mxu0 0.0
        %1364 = vmatpush1.msra.mxu0 0.0
        %1365 = vmatprep.subr.mxu0 0.0
        %1366 = vmatpush1.msra.mxu0 0.0
        %1367 = vmatprep.subr.mxu0 0.0
        %1368 = vmatpush1.msra.mxu0 0.0
        %1369 = vmatprep.subr.mxu0 0.0
        %1370 = vmatpush1.msra.mxu0 0.0
        %1371 = vmatprep.subr.mxu0 0.0
        %1372 = vmatpush1.msra.mxu0 0.0
        %1373 = vmatprep.subr.mxu0 0.0
        %1374 = vmatpush1.msra.mxu0 0.0
        %1375 = vmatprep.subr.mxu0 0.0
        %1376 = vmatpush1.msra.mxu0 0.0
        %1377 = vmatprep.subr.mxu0 0.0
        %1378 = vmatpush1.msra.mxu0 0.0
        %1379 = vmatprep.subr.mxu0 0.0
        %1380 = vmatpush1.msra.mxu0 0.0
        %1381 = vmatprep.subr.mxu0 0.0
        %1382 = vmatpush1.msra.mxu0 0.0
        %1383 = vmatprep.subr.mxu0 0.0
        %1384 = vmatpush1.msra.mxu0 0.0
        %1385 = vmatprep.subr.mxu0 0.0
        %1386 = vmatpush1.msra.mxu0 0.0
        %1387 = vmatprep.mubr.f32.mxu0 0.0
        %1388 = vmatmul.mubr.f32.gmra.mrb[0].mxu0 %v1318
        %v1389 = vpop.f32.mrb[0].mxu0
        %v1390 = vadd.f32 0.0, %v1389
        %v1391 = vpop.f32.mrb[0].mxu0
        %1392 = vmatprep.mubr.f32.mxu0 0.0
        %1393 = vmatmul.mubr.f32.gmra.mrb[0].mxu0 %v1321
        %v1394 = vpop.f32.mrb[0].mxu0
        %v1395 = vadd.f32 0.0, %v1394
        %v1396 = vpop.f32.mrb[0].mxu0
        %1397 = vdwg.mxu0
        %v1398 = vld [vmem:[#allocation4] sm:$0xff]
        %v1399 = vld [vmem:[#allocation4 + $0x8] sm:$0xff]
        %v1400 = vld [vmem:[#allocation14 + $0x10] sm:$0xff]
        %v1401 = vld [vmem:[#allocation14 + $0x18] sm:$0xff]
        %v1403 = vsel %vm670, %v1390, 0
        %v1406 = vsel %vm670, %v1395, 0
        %1408 = vmatprep.subr.mxu0 0.0
        %1409 = vmatpush1.msra.mxu0 %v1400
        %1410 = vmatprep.subr.mxu0 0.0
        %1411 = vmatpush1.msra.mxu0 %v1401
        %1412 = vmatprep.subr.mxu0 0.0
        %1413 = vmatpush1.msra.mxu0 0.0
        %1414 = vmatprep.subr.mxu0 0.0
        %1415 = vmatpush1.msra.mxu0 0.0
        %1416 = vmatprep.subr.mxu0 0.0
        %1417 = vmatpush1.msra.mxu0 0.0
        %1418 = vmatprep.subr.mxu0 0.0
        %1419 = vmatpush1.msra.mxu0 0.0
        %1420 = vmatprep.subr.mxu0 0.0
        %1421 = vmatpush1.msra.mxu0 0.0
        %1422 = vmatprep.subr.mxu0 0.0
        %1423 = vmatpush1.msra.mxu0 0.0
        %1424 = vmatprep.subr.mxu0 0.0
        %1425 = vmatpush1.msra.mxu0 0.0
        %1426 = vmatprep.subr.mxu0 0.0
        %1427 = vmatpush1.msra.mxu0 0.0
        %1428 = vmatprep.subr.mxu0 0.0
        %1429 = vmatpush1.msra.mxu0 0.0
        %1430 = vmatprep.subr.mxu0 0.0
        %1431 = vmatpush1.msra.mxu0 0.0
        %1432 = vmatprep.subr.mxu0 0.0
        %1433 = vmatpush1.msra.mxu0 0.0
        %1434 = vmatprep.subr.mxu0 0.0
        %1435 = vmatpush1.msra.mxu0 0.0
        %1436 = vmatprep.subr.mxu0 0.0
        %1437 = vmatpush1.msra.mxu0 0.0
        %1438 = vmatprep.subr.mxu0 0.0
        %1439 = vmatpush1.msra.mxu0 0.0
        %1440 = vmatprep.subr.mxu0 0.0
        %1441 = vmatpush1.msra.mxu0 0.0
        %1442 = vmatprep.subr.mxu0 0.0
        %1443 = vmatpush1.msra.mxu0 0.0
        %1444 = vmatprep.subr.mxu0 0.0
        %1445 = vmatpush1.msra.mxu0 0.0
        %1446 = vmatprep.subr.mxu0 0.0
        %1447 = vmatpush1.msra.mxu0 0.0
        %1448 = vmatprep.subr.mxu0 0.0
        %1449 = vmatpush1.msra.mxu0 0.0
        %1450 = vmatprep.subr.mxu0 0.0
        %1451 = vmatpush1.msra.mxu0 0.0
        %1452 = vmatprep.subr.mxu0 0.0
        %1453 = vmatpush1.msra.mxu0 0.0
        %1454 = vmatprep.subr.mxu0 0.0
        %1455 = vmatpush1.msra.mxu0 0.0
        %1456 = vmatprep.subr.mxu0 0.0
        %1457 = vmatpush1.msra.mxu0 0.0
        %1458 = vmatprep.subr.mxu0 0.0
        %1459 = vmatpush1.msra.mxu0 0.0
        %1460 = vmatprep.subr.mxu0 0.0
        %1461 = vmatpush1.msra.mxu0 0.0
        %1462 = vmatprep.subr.mxu0 0.0
        %1463 = vmatpush1.msra.mxu0 0.0
        %1464 = vmatprep.subr.mxu0 0.0
        %1465 = vmatpush1.msra.mxu0 0.0
        %1466 = vmatprep.subr.mxu0 0.0
        %1467 = vmatpush1.msra.mxu0 0.0
        %1468 = vmatprep.subr.mxu0 0.0
        %1469 = vmatpush1.msra.mxu0 0.0
        %1470 = vmatprep.subr.mxu0 0.0
        %1471 = vmatpush1.msra.mxu0 0.0
        %1472 = vmatprep.mubr.f32.mxu0 0.0
        %1473 = vmatmul.mubr.f32.gmra.mrb[0].mxu0 %v1403
        %v1474 = vpop.f32.mrb[0].mxu0
        %v1475 = vadd.f32 0.0, %v1474
        %v1476 = vpop.f32.mrb[0].mxu0
        %1477 = vmatprep.mubr.f32.mxu0 0.0
        %1478 = vmatmul.mubr.f32.gmra.mrb[0].mxu0 %v1406
        %v1479 = vpop.f32.mrb[0].mxu0
        %v1480 = vadd.f32 0.0, %v1479
        %v1481 = vpop.f32.mrb[0].mxu0
        %1482 = vdwg.mxu0
        %v1483 = vadd.f32 %v1398, %v1475
        %v1484 = vadd.f32 %v1399, %v1480
        %1485 = vst.msk [vmem:[#allocation4] sm:$0xff] %vm498, %v1483
        %1486 = vst.msk [vmem:[#allocation4 + $0x8] sm:$0xff] %vm498, %v1484
        %1487 = vrot.lane.b32.xlu0 %v1201, 112
        %v1488 = vpop.permute.xlu0 %1487
        %1489 = vrot.lane.b32.xlu0 %v1199, 80
        %v1490 = vpop.permute.xlu0 %1489
        %1491 = vrot.lane.b32.xlu0 %v1200, 80
        %v1492 = vpop.permute.xlu0 %1491
        %v1493 = vsel %vm670, %v1488, 0
        %v1495 = vsel %vm670, %v1490, 0
        %v1497 = vsel %vm670, %v1492, 0
        %1499 = vmatprep.subr.mxu0 0.0
        %1500 = vmatpush1.xpose.msra.mxu0 %v1495
        %1501 = vmatprep.subr.mxu0 0.0
        %1502 = vmatpush1.xpose.msra.mxu0 %v1497
        %1503 = vmatprep.subr.mxu0 0.0
        %1504 = vmatpush1.xpose.msra.mxu0 0.0
        %1505 = vmatprep.subr.mxu0 0.0
        %1506 = vmatpush1.xpose.msra.mxu0 0.0
        %1507 = vmatprep.subr.mxu0 0.0
        %1508 = vmatpush1.xpose.msra.mxu0 0.0
        %1509 = vmatprep.subr.mxu0 0.0
        %1510 = vmatpush1.xpose.msra.mxu0 0.0
        %1511 = vmatprep.subr.mxu0 0.0
        %1512 = vmatpush1.xpose.msra.mxu0 0.0
        %1513 = vmatprep.subr.mxu0 0.0
        %1514 = vmatpush1.xpose.msra.mxu0 0.0
        %1515 = vmatprep.subr.mxu0 0.0
        %1516 = vmatpush1.xpose.msra.mxu0 0.0
        %1517 = vmatprep.subr.mxu0 0.0
        %1518 = vmatpush1.xpose.msra.mxu0 0.0
        %1519 = vmatprep.subr.mxu0 0.0
        %1520 = vmatpush1.xpose.msra.mxu0 0.0
        %1521 = vmatprep.subr.mxu0 0.0
        %1522 = vmatpush1.xpose.msra.mxu0 0.0
        %1523 = vmatprep.subr.mxu0 0.0
        %1524 = vmatpush1.xpose.msra.mxu0 0.0
        %1525 = vmatprep.subr.mxu0 0.0
        %1526 = vmatpush1.xpose.msra.mxu0 0.0
        %1527 = vmatprep.subr.mxu0 0.0
        %1528 = vmatpush1.xpose.msra.mxu0 0.0
        %1529 = vmatprep.subr.mxu0 0.0
        %1530 = vmatpush1.xpose.msra.mxu0 0.0
        %1531 = vmatprep.subr.mxu0 0.0
        %1532 = vmatpush1.xpose.msra.mxu0 0.0
        %1533 = vmatprep.subr.mxu0 0.0
        %1534 = vmatpush1.xpose.msra.mxu0 0.0
        %1535 = vmatprep.subr.mxu0 0.0
        %1536 = vmatpush1.xpose.msra.mxu0 0.0
        %1537 = vmatprep.subr.mxu0 0.0
        %1538 = vmatpush1.xpose.msra.mxu0 0.0
        %1539 = vmatprep.subr.mxu0 0.0
        %1540 = vmatpush1.xpose.msra.mxu0 0.0
        %1541 = vmatprep.subr.mxu0 0.0
        %1542 = vmatpush1.xpose.msra.mxu0 0.0
        %1543 = vmatprep.subr.mxu0 0.0
        %1544 = vmatpush1.xpose.msra.mxu0 0.0
        %1545 = vmatprep.subr.mxu0 0.0
        %1546 = vmatpush1.xpose.msra.mxu0 0.0
        %1547 = vmatprep.subr.mxu0 0.0
        %1548 = vmatpush1.xpose.msra.mxu0 0.0
        %1549 = vmatprep.subr.mxu0 0.0
        %1550 = vmatpush1.xpose.msra.mxu0 0.0
        %1551 = vmatprep.subr.mxu0 0.0
        %1552 = vmatpush1.xpose.msra.mxu0 0.0
        %1553 = vmatprep.subr.mxu0 0.0
        %1554 = vmatpush1.xpose.msra.mxu0 0.0
        %1555 = vmatprep.subr.mxu0 0.0
        %1556 = vmatpush1.xpose.msra.mxu0 0.0
        %1557 = vmatprep.subr.mxu0 0.0
        %1558 = vmatpush1.xpose.msra.mxu0 0.0
        %1559 = vmatprep.subr.mxu0 0.0
        %1560 = vmatpush1.xpose.msra.mxu0 0.0
        %1561 = vmatprep.subr.mxu0 0.0
        %1562 = vmatpush1.xpose.msra.mxu0 0.0
        %1563 = vmatprep.mubr.f32.mxu0 0.0
        %1564 = vmatmul.mubr.f32.gmra.mrb[0].mxu0 %v1493
        %v1565 = vpop.f32.mrb[0].mxu0
        %v1566 = vadd.f32 0.0, %v1565
        %v1567 = vpop.f32.mrb[0].mxu0
        %1568 = vdwg.mxu0
        %v1569 = vsel %vm670, %v1566, -inf
        %1570 = vmax.xlane.f32.xlu0 %v1569
        %v1571 = vpop.xlane.xlu0 %1570
        %v1572 = vsub.f32 %v1566, %v1571
        %v1573 = vmul.f32 %v1572, 1.442695
        %v1574 = vpow.pop %v1573
        %v1575 = vsel %vm670, %v1574, 0.0
        %1576 = vadd.xlane.f32.xlu0 %v1575
        %v1577 = vpop.xlane.xlu0 %1576
        %v1578 = vrcp.pop %v1577
        %v1579 = vmul.f32 %v1574, %v1578
        %s1580 = scalar_lea.vmem %s490, 8 [#allocation20]
        %1581 = vst.msk [vmem:[%s1580] sm:$0xff] %vm670, %v1579
        %1582 = vrot.lane.b32.xlu0 %v1199, 48
        %v1583 = vpop.permute.xlu0 %1582
        %1584 = vrot.lane.b32.xlu0 %v1200, 48
        %v1585 = vpop.permute.xlu0 %1584
        %v1589 = vsel %vm670, %v1579, 0
        %1591 = vmatprep.subr.mxu0 0.0
        %1592 = vmatpush1.msra.mxu0 %v1583
        %1593 = vmatprep.subr.mxu0 0.0
        %1594 = vmatpush1.msra.mxu0 %v1585
        %1595 = vmatprep.subr.mxu0 0.0
        %1596 = vmatpush1.msra.mxu0 0.0
        %1597 = vmatprep.subr.mxu0 0.0
        %1598 = vmatpush1.msra.mxu0 0.0
        %1599 = vmatprep.subr.mxu0 0.0
        %1600 = vmatpush1.msra.mxu0 0.0
        %1601 = vmatprep.subr.mxu0 0.0
        %1602 = vmatpush1.msra.mxu0 0.0
        %1603 = vmatprep.subr.mxu0 0.0
        %1604 = vmatpush1.msra.mxu0 0.0
        %1605 = vmatprep.subr.mxu0 0.0
        %1606 = vmatpush1.msra.mxu0 0.0
        %1607 = vmatprep.subr.mxu0 0.0
        %1608 = vmatpush1.msra.mxu0 0.0
        %1609 = vmatprep.subr.mxu0 0.0
        %1610 = vmatpush1.msra.mxu0 0.0
        %1611 = vmatprep.subr.mxu0 0.0
        %1612 = vmatpush1.msra.mxu0 0.0
        %1613 = vmatprep.subr.mxu0 0.0
        %1614 = vmatpush1.msra.mxu0 0.0
        %1615 = vmatprep.subr.mxu0 0.0
        %1616 = vmatpush1.msra.mxu0 0.0
        %1617 = vmatprep.subr.mxu0 0.0
        %1618 = vmatpush1.msra.mxu0 0.0
        %1619 = vmatprep.subr.mxu0 0.0
        %1620 = vmatpush1.msra.mxu0 0.0
        %1621 = vmatprep.subr.mxu0 0.0
        %1622 = vmatpush1.msra.mxu0 0.0
        %1623 = vmatprep.subr.mxu0 0.0
        %1624 = vmatpush1.msra.mxu0 0.0
        %1625 = vmatprep.subr.mxu0 0.0
        %1626 = vmatpush1.msra.mxu0 0.0
        %1627 = vmatprep.subr.mxu0 0.0
        %1628 = vmatpush1.msra.mxu0 0.0
        %1629 = vmatprep.subr.mxu0 0.0
        %1630 = vmatpush1.msra.mxu0 0.0
        %1631 = vmatprep.subr.mxu0 0.0
        %1632 = vmatpush1.msra.mxu0 0.0
        %1633 = vmatprep.subr.mxu0 0.0
        %1634 = vmatpush1.msra.mxu0 0.0
        %1635 = vmatprep.subr.mxu0 0.0
        %1636 = vmatpush1.msra.mxu0 0.0
        %1637 = vmatprep.subr.mxu0 0.0
        %1638 = vmatpush1.msra.mxu0 0.0
        %1639 = vmatprep.subr.mxu0 0.0
        %1640 = vmatpush1.msra.mxu0 0.0
        %1641 = vmatprep.subr.mxu0 0.0
        %1642 = vmatpush1.msra.mxu0 0.0
        %1643 = vmatprep.subr.mxu0 0.0
        %1644 = vmatpush1.msra.mxu0 0.0
        %1645 = vmatprep.subr.mxu0 0.0
        %1646 = vmatpush1.msra.mxu0 0.0
        %1647 = vmatprep.subr.mxu0 0.0
        %1648 = vmatpush1.msra.mxu0 0.0
        %1649 = vmatprep.subr.mxu0 0.0
        %1650 = vmatpush1.msra.mxu0 0.0
        %1651 = vmatprep.subr.mxu0 0.0
        %1652 = vmatpush1.msra.mxu0 0.0
        %1653 = vmatprep.subr.mxu0 0.0
        %1654 = vmatpush1.msra.mxu0 0.0
        %1655 = vmatprep.mubr.f32.mxu0 0.0
        %1656 = vmatmul.mubr.f32.gmra.mrb[0].mxu0 %v1589
        %v1657 = vpop.f32.mrb[0].mxu0
        %v1658 = vadd.f32 0.0, %v1657
        %v1659 = vpop.f32.mrb[0].mxu0
        %1660 = vdwg.mxu0
        %v1661 = vld [vmem:[#allocation5] sm:$0xff]
        %v1662 = vld [vmem:[#allocation15 + $0x10] sm:$0xff]
        %v1663 = vld [vmem:[#allocation15 + $0x18] sm:$0xff]
        %v1665 = vsel %vm670, %v1658, 0
        %1667 = vmatprep.subr.mxu0 0.0
        %1668 = vmatpush1.msra.mxu0 %v1662
        %1669 = vmatprep.subr.mxu0 0.0
        %1670 = vmatpush1.msra.mxu0 %v1663
        %1671 = vmatprep.subr.mxu0 0.0
        %1672 = vmatpush1.msra.mxu0 0.0
        %1673 = vmatprep.subr.mxu0 0.0
        %1674 = vmatpush1.msra.mxu0 0.0
        %1675 = vmatprep.subr.mxu0 0.0
        %1676 = vmatpush1.msra.mxu0 0.0
        %1677 = vmatprep.subr.mxu0 0.0
        %1678 = vmatpush1.msra.mxu0 0.0
        %1679 = vmatprep.subr.mxu0 0.0
        %1680 = vmatpush1.msra.mxu0 0.0
        %1681 = vmatprep.subr.mxu0 0.0
        %1682 = vmatpush1.msra.mxu0 0.0
        %1683 = vmatprep.subr.mxu0 0.0
        %1684 = vmatpush1.msra.mxu0 0.0
        %1685 = vmatprep.subr.mxu0 0.0
        %1686 = vmatpush1.msra.mxu0 0.0
        %1687 = vmatprep.subr.mxu0 0.0
        %1688 = vmatpush1.msra.mxu0 0.0
        %1689 = vmatprep.subr.mxu0 0.0
        %1690 = vmatpush1.msra.mxu0 0.0
        %1691 = vmatprep.subr.mxu0 0.0
        %1692 = vmatpush1.msra.mxu0 0.0
        %1693 = vmatprep.subr.mxu0 0.0
        %1694 = vmatpush1.msra.mxu0 0.0
        %1695 = vmatprep.subr.mxu0 0.0
        %1696 = vmatpush1.msra.mxu0 0.0
        %1697 = vmatprep.subr.mxu0 0.0
        %1698 = vmatpush1.msra.mxu0 0.0
        %1699 = vmatprep.subr.mxu0 0.0
        %1700 = vmatpush1.msra.mxu0 0.0
        %1701 = vmatprep.subr.mxu0 0.0
        %1702 = vmatpush1.msra.mxu0 0.0
        %1703 = vmatprep.subr.mxu0 0.0
        %1704 = vmatpush1.msra.mxu0 0.0
        %1705 = vmatprep.subr.mxu0 0.0
        %1706 = vmatpush1.msra.mxu0 0.0
        %1707 = vmatprep.subr.mxu0 0.0
        %1708 = vmatpush1.msra.mxu0 0.0
        %1709 = vmatprep.subr.mxu0 0.0
        %1710 = vmatpush1.msra.mxu0 0.0
        %1711 = vmatprep.subr.mxu0 0.0
        %1712 = vmatpush1.msra.mxu0 0.0
        %1713 = vmatprep.subr.mxu0 0.0
        %1714 = vmatpush1.msra.mxu0 0.0
        %1715 = vmatprep.subr.mxu0 0.0
        %1716 = vmatpush1.msra.mxu0 0.0
        %1717 = vmatprep.subr.mxu0 0.0
        %1718 = vmatpush1.msra.mxu0 0.0
        %1719 = vmatprep.subr.mxu0 0.0
        %1720 = vmatpush1.msra.mxu0 0.0
        %1721 = vmatprep.subr.mxu0 0.0
        %1722 = vmatpush1.msra.mxu0 0.0
        %1723 = vmatprep.subr.mxu0 0.0
        %1724 = vmatpush1.msra.mxu0 0.0
        %1725 = vmatprep.subr.mxu0 0.0
        %1726 = vmatpush1.msra.mxu0 0.0
        %1727 = vmatprep.subr.mxu0 0.0
        %1728 = vmatpush1.msra.mxu0 0.0
        %1729 = vmatprep.subr.mxu0 0.0
        %1730 = vmatpush1.msra.mxu0 0.0
        %1731 = vmatprep.mubr.f32.mxu0 0.0
        %1732 = vmatmul.mubr.f32.gmra.mrb[0].mxu0 %v1665
        %v1733 = vpop.f32.mrb[0].mxu0
        %v1734 = vadd.f32 0.0, %v1733
        %v1735 = vpop.f32.mrb[0].mxu0
        %1736 = vdwg.mxu0
        %v1737 = vadd.f32 %v1661, %v1734
        %1738 = vst.msk [vmem:[#allocation5] sm:$0xff] %vm498, %v1737
        %v1739 = vld [vmem:[#allocation4] sm:$0xff]
        %v1740 = vld [vmem:[#allocation4 + $0x8] sm:$0xff]
        %v1741 = vld [vmem:[%s5] sm:$0x1]
        %v1743 = vlaneseq
        %v1744 = vshrl.u32 %v1743, 7
        %v1745 = vsub.s32 0, %v1744
        %v1746 = vrot.slane %v1741, %v1745
        %v1748 = vadd.f32 %v1739, %v1746
        %v1749 = vadd.f32 %v1740, %v1746
        %1750 = vst.msk [vmem:[%s476] sm:$0xff] %vm498, %v1748
        %1751 = vst.msk [vmem:[%s476 + $0x8] sm:$0xff] %vm498, %v1749
        %v1752 = vld [vmem:[#allocation5] sm:$0xff]
        %v1753 = vld [vmem:[%s7] sm:$0x1]
        %v1755 = vlaneseq
        %v1756 = vshrl.u32 %v1755, 7
        %v1757 = vsub.s32 0, %v1756
        %v1758 = vrot.slane %v1753, %v1757
        %v1760 = vadd.f32 %v1752, %v1758
        %1761 = vst.msk [vmem:[%s483] sm:$0xff] %vm498, %v1760
        %s1762 = sand.u32 %s222, 1
        %s1763 = scalar_lea.sflag [#allocation8], %s1762
        %s1764 = sand.u32 %s222, 1
        %s1765 = smul.addr %s1764, 16
        %s1766 = scalar_lea.vmem [#allocation17], %s1765
        %s1767 = sand.u32 %s36, 1
        %s1768 = scalar_lea.sflag [#allocation19], %s1767
        %s1769 = sand.u32 %s248, 1
        %s1770 = smul.addr %s1769, 8
        %s1771 = scalar_lea.vmem [#allocation18], %s1770
        %s1772 = sand.u32 %s36, 1
        %s1773 = scalar_lea.sflag [#allocation19], %s1772
        %s1774 = sand.u32 %s274, 1
        %s1775 = smul.addr %s1774, 16
        %s1776 = scalar_lea.vmem [#allocation20], %s1775
        // Predicated region
        $region77: #{tpu_custom_call.1} parent=51 // pred_check
          %p1777 = pneg %p232
        $region78: #{tpu_custom_call.1} parent=51 // pred_check_branch
          %1779 = sbr.rel (%p1777) target = $region80
        $region79: #{tpu_custom_call.1} parent=51 // pred_region
          %s1781 = ssub.s32 256, 256
          %1782 = vsyncadd %s1763, %s1781
          %s1783 = smul.addr %s36, 2
          %s1784 = smul.addr %s1783, 128
          %s1785 = scalar_lea.hbm %s8, %s1784
          %s1786 = sshll.u32 %s1766, 4
          %s1787 = int_to_ptr.vmem [resolvable:$true] %s1786
          %1792 = dma.vmem_to_hbm [thread:$0]  %s1787, 256, %s1785, %s1763, 128, 128, 8
        $region80: #{tpu_custom_call.1} parent=51 // pred_fallthru
          _
        // Predicated region
        $region81: #{tpu_custom_call.1} parent=51 // pred_check
          %p1793 = pneg %p258
        $region82: #{tpu_custom_call.1} parent=51 // pred_check_branch
          %1795 = sbr.rel (%p1793) target = $region84
        $region83: #{tpu_custom_call.1} parent=51 // pred_region
          %s1797 = ssub.s32 128, 128
          %1798 = vsyncadd %s1768, %s1797
          %s1799 = smul.addr %s36, 128
          %s1800 = scalar_lea.hbm %s9, %s1799
          %s1802 = sshll.u32 %s1771, 4
          %s1803 = int_to_ptr.vmem [resolvable:$true] %s1802
          %1805 = dma.vmem_to_hbm [thread:$0]  %s1803, 128, %s1800, %s1768
        $region84: #{tpu_custom_call.1} parent=51 // pred_fallthru
          _
        // Predicated region
        $region85: #{tpu_custom_call.1} parent=51 // pred_check
          %p1806 = pneg %p284
        $region86: #{tpu_custom_call.1} parent=51 // pred_check_branch
          %1808 = sbr.rel (%p1806) target = $region88
        $region87: #{tpu_custom_call.1} parent=51 // pred_region
          %s1810 = ssub.s32 256, 256
          %1811 = vsyncadd %s1773, %s1810
          %s1812 = smul.addr %s36, 2
          %s1813 = smul.addr %s1812, 128
          %s1814 = scalar_lea.hbm %s10, %s1813
          %s1815 = sshll.u32 %s1776, 4
          %s1816 = int_to_ptr.vmem [resolvable:$true] %s1815
          %1821 = dma.vmem_to_hbm [thread:$0]  %s1816, 256, %s1814, %s1773, 128, 128, 8
        $region88: #{tpu_custom_call.1} parent=51 // pred_fallthru
          _
      $region52: #{tpu_custom_call.1} parent=5 // pred_fallthru
        _
      %p1822 = scmp.le.s32.totalorder 2, %s31
      // Predicated region
      $region89: #{tpu_custom_call.1} parent=5 // pred_check
        %p1823 = pneg %p1822
      $region90: #{tpu_custom_call.1} parent=5 // pred_check_branch
        %1825 = sbr.rel (%p1823) target = $region92
      $region91: #{tpu_custom_call.1} parent=5 // pred_region
        %s1826 = ssub.s32 %s31, 2
        // Predicated region
        $region93: #{tpu_custom_call.1} parent=91 // pred_check
          %p1827 = pneg %p238
        $region94: #{tpu_custom_call.1} parent=91 // pred_check_branch
          %1829 = sbr.rel (%p1827) target = $region96
        $region95: #{tpu_custom_call.1} parent=91 // pred_region
          %s1830 = sand.u32 %s223, 1
          %s1831 = scalar_lea.sflag [#allocation8], %s1830
          %s1832 = sand.u32 %s223, 1
          %s1833 = smul.addr %s1832, 16
          %s1834 = scalar_lea.vmem [#allocation17], %s1833
          %1835 = dma.done %s1831, 256
        $region96: #{tpu_custom_call.1} parent=91 // pred_fallthru
          _
        // Predicated region
        $region97: #{tpu_custom_call.1} parent=91 // pred_check
          %p1836 = pneg %p264
        $region98: #{tpu_custom_call.1} parent=91 // pred_check_branch
          %1838 = sbr.rel (%p1836) target = $region100
        $region99: #{tpu_custom_call.1} parent=91 // pred_region
          %s1839 = sand.u32 %s37, 1
          %s1840 = scalar_lea.sflag [#allocation19], %s1839
          %s1841 = sand.u32 %s249, 1
          %s1842 = smul.addr %s1841, 8
          %s1843 = scalar_lea.vmem [#allocation18], %s1842
          %1844 = dma.done %s1840, 128
        $region100: #{tpu_custom_call.1} parent=91 // pred_fallthru
          _
        // Predicated region
        $region101: #{tpu_custom_call.1} parent=91 // pred_check
          %p1845 = pneg %p290
        $region102: #{tpu_custom_call.1} parent=91 // pred_check_branch
          %1847 = sbr.rel (%p1845) target = $region104
        $region103: #{tpu_custom_call.1} parent=91 // pred_region
          %s1848 = sand.u32 %s37, 1
          %s1849 = scalar_lea.sflag [#allocation19], %s1848
          %s1850 = sand.u32 %s275, 1
          %s1851 = smul.addr %s1850, 16
          %s1852 = scalar_lea.vmem [#allocation20], %s1851
          %1853 = dma.done %s1849, 256
        $region104: #{tpu_custom_call.1} parent=91 // pred_fallthru
          _
      $region92: #{tpu_custom_call.1} parent=5 // pred_fallthru
        _
    $region6: #{tpu_custom_call.1} parent=1 // loop_footer
      %s35 = sadd.s32 1, %s31
    $region7: #{tpu_custom_call.1} parent=1 // loop_footer_branch
      %30 = sbr.rel target = $region3
    $region8: #{tpu_custom_call.1} parent=1 // loop_exit
      _
    %1854 = vsyncpa [#allocation7], 1
    %s1855 = scalar_lea.sflag [#allocation7], 1
    %1856 = vsyncpa %s1855, 1
    %1857 = vsyncpa [#allocation10], 1
    %s1858 = scalar_lea.sflag [#allocation10], 1
    %1859 = vsyncpa %s1858, 1
    %1860 = vsyncpa [#allocation13], 1
    %1861 = vsyncpa [#allocation16], 1
    %1862 = vsyncpa [#allocation8], 1
    %s1863 = scalar_lea.sflag [#allocation8], 1
    %1864 = vsyncpa %s1863, 1
    %1865 = vsyncpa [#allocation19], 1
    %s1866 = scalar_lea.sflag [#allocation19], 1
    %1867 = vsyncpa %s1866, 1

</llo_original>
